<compile_context>
chip_gen: v6e
topology: v6e:2x2x1
jax: 0.10.0
libtpu: 0.0.40
codegen_flags: <defaults>
</compile_context>

<pallas_src>
import functools

import jax
import jax.numpy as jnp
from jax.experimental import pallas as pl
from jax.experimental.pallas import tpu as pltpu


def dmn_kernel(scale_ref,                      # SMEM (3,) f32 (scalar prefetch)
               x_ref,                          # (tb, F) f32
               wf_ref, bf_ref,                 # (F, H) bf16, (1, H) f32
               w1_ref, b1_ref, w2_ref, b2_ref, w3_ref, b3_ref,
               wo_ref, bo_ref,                 # (H, O) bf16, (1, O) f32
               out_ref,                        # (tb, O) f32
               *, vision_dim, audio_dim):
    fusion_in = x_ref.shape[-1]

    # relu(modality_scale) -> per-lane scale over the concatenated slab.
    # Built once per grid step (cheap VPU/XLU filler, hidden under MXU slack).
    sv = jnp.maximum(scale_ref[0], 0.0)
    sa = jnp.maximum(scale_ref[1], 0.0)
    si = jnp.maximum(scale_ref[2], 0.0)
    lane = jax.lax.broadcasted_iota(jnp.int32, (1, fusion_in), 1)
    lane_scale = jnp.where(lane < vision_dim, sv,
                           jnp.where(lane < vision_dim + audio_dim, sa, si))

    def lin(h_bf16, w_ref, b_ref):
        # bf16 operands on the MXU, f32 accumulation, f32 bias add.
        return jnp.dot(h_bf16, w_ref[...],
                       preferred_element_type=jnp.float32) + b_ref[...]

    # Modality scaling in f32 (v5e-safe); one bf16 cast per layer so the live
    # (tb, H) inter-layer intermediates stay half-width.
    x = (x_ref[...] * lane_scale).astype(jnp.bfloat16)
    h = jnp.tanh(lin(x, wf_ref, bf_ref)).astype(jnp.bfloat16)            # fusion
    h = jnp.maximum(lin(h, w1_ref, b1_ref), 0.0).astype(jnp.bfloat16)    # router
    h = jnp.maximum(lin(h, w2_ref, b2_ref), 0.0).astype(jnp.bfloat16)
    h = jnp.maximum(lin(h, w3_ref, b3_ref), 0.0).astype(jnp.bfloat16)
    out_ref[...] = lin(h, wo_ref, bo_ref)                                # output


def default_mode_network(vision, audio, intero, params, *, batch_tile=256):
    """Whole forward pass fused into a single Pallas kernel.

    Weights stay VMEM-resident (constant index_map, single-buffered); the
    batch axis is 'parallel' so multi-step grids shard across v7x's 2 TCs."""
    V = vision.shape[-1]
    A = audio.shape[-1]

    # Layout plumbing only: present modalities as one lane-dense slab.
    x = jnp.concatenate([vision, audio, intero], axis=-1).astype(jnp.float32)
    B, F = x.shape
    H = params["wf"].shape[1]
    O = params["wo"].shape[1]

    # Batch tiling: one full-batch step whenever it fits (avoids tiny multi-
    # step grids); otherwise MXU-friendly tiles (256 on v6e/v7x, pass 128 on
    # v5e) with zero-padding for arbitrary batch sizes.
    if B <= batch_tile:
        tb, B_pad = B, B
    else:
        assert batch_tile % 8 == 0 and batch_tile >= 16, batch_tile
        tb = batch_tile
        B_pad = pl.cdiv(B, tb) * tb
        if B_pad != B:
            x = jnp.pad(x, ((0, B_pad - B), (0, 0)))
    grid = (B_pad // tb,)

    kernel = functools.partial(dmn_kernel, vision_dim=V, audio_dim=A)

    batch_map = lambda i, s: (i, 0)   # activations/output: tile over batch
    const_map = lambda i, s: (0, 0)   # weights/biases: resident across grid

    weight_bytes = sum(
        int(params[k].size) * params[k].dtype.itemsize
        for k in ("wf", "bf", "w1", "b1", "w2", "b2", "w3", "b3", "wo", "bo"))
    cost = pl.CostEstimate(
        flops=2 * B_pad * (F * H + 3 * H * H + H * O),
        transcendentals=B_pad * H,
        bytes_accessed=weight_bytes + B_pad * F * 4 + B_pad * O * 4)

    # VMEM budget: single-buffered weights + double-buffered activation tiles
    # + a few live (tb, H) intermediates; 2x headroom, never below the 32 MiB
    # default, clamped to the v7x-safe 64 MiB.
    act_bytes = 2 * (tb * F * 4 + tb * O * 4) + 4 * tb * H * 4
    vmem_limit = int(min(max(2 * (weight_bytes + act_bytes), 32 << 20), 64 << 20))

    def run(single_buffer_weights):
        if single_buffer_weights:
            wspec = lambda shape: pl.BlockSpec(shape, const_map,
                                               pipeline_mode=pl.Buffered(1))
        else:
            wspec = lambda shape: pl.BlockSpec(shape, const_map)
        call = pl.pallas_call(
            kernel,
            out_shape=jax.ShapeDtypeStruct((B_pad, O), jnp.float32),
            grid_spec=pltpu.PrefetchScalarGridSpec(
                num_scalar_prefetch=1,
                grid=grid,
                in_specs=[
                    pl.BlockSpec((tb, F), batch_map),   # x
                    wspec((F, H)), wspec((1, H)),       # wf, bf
                    wspec((H, H)), wspec((1, H)),       # w1, b1
                    wspec((H, H)), wspec((1, H)),       # w2, b2
                    wspec((H, H)), wspec((1, H)),       # w3, b3
                    wspec((H, O)), wspec((1, O)),       # wo, bo
                ],
                out_specs=pl.BlockSpec((tb, O), batch_map),
            ),
            compiler_params=pltpu.CompilerParams(
                dimension_semantics=("parallel",),
                vmem_limit_bytes=vmem_limit),
            cost_estimate=cost,
        )
        return call(params["modality_scale"].astype(jnp.float32),
                    x,
                    params["wf"], params["bf"],
                    params["w1"], params["b1"],
                    params["w2"], params["b2"],
                    params["w3"], params["b3"],
                    params["wo"], params["bo"])

    try:
        out = run(True)    # single-buffered resident weights (VMEM headroom)
    except Exception:      # jax without BlockSpec pipeline_mode support
        out = run(False)
    return out[:B] if B_pad != B else out


def init_params(key, vision_dim, audio_dim, intero_dim, hidden_dim, output_dim):
    """nn.Linear-style init (uniform(-1/sqrt(fan_in), +)); weights in bf16."""
    def lin(k, fan_in, fan_out):
        kw, kb = jax.random.split(k)
        bound = 1.0 / jnp.sqrt(jnp.float32(fan_in))
        w = jax.random.uniform(kw, (fan_in, fan_out), jnp.float32, -bound, bound)
        b = jax.random.uniform(kb, (1, fan_out), jnp.float32, -bound, bound)
        return w.astype(jnp.bfloat16), b   # bf16 weights, f32 biases

    ks = jax.random.split(key, 5)
    fusion_in = vision_dim + audio_dim + intero_dim
    wf, bf = lin(ks[0], fusion_in, hidden_dim)
    w1, b1 = lin(ks[1], hidden_dim, hidden_dim)
    w2, b2 = lin(ks[2], hidden_dim, hidden_dim)
    w3, b3 = lin(ks[3], hidden_dim, hidden_dim)
    wo, bo = lin(ks[4], hidden_dim, output_dim)

    return {
        "modality_scale": jnp.array([1.0, 1.0, 1.0], jnp.float32),
        "wf": wf, "bf": bf,
        "w1": w1, "b1": b1,
        "w2": w2, "b2": b2,
        "w3": w3, "b3": b3,
        "wo": wo, "bo": bo,
    }


def reference(vision, audio, intero, p):
    """Pure-JAX reference matching the PyTorch forward (same bf16 weight math).

    Note: bf16 weights + bf16 operands match the kernel, not an f32 PyTorch
    forward bit-for-bit; tolerance 1e-2 documents that choice."""
    scale = jnp.maximum(p["modality_scale"], 0.0)
    combined = jnp.concatenate(
        [vision * scale[0], audio * scale[1], intero * scale[2]], axis=-1)

    def lin(x_bf16, w, b):
        return jnp.dot(x_bf16, w, preferred_element_type=jnp.float32) + b

    x = combined.astype(jnp.bfloat16)
    h = jnp.tanh(lin(x, p["wf"], p["bf"])).astype(jnp.bfloat16)
    h = jnp.maximum(lin(h, p["w1"], p["b1"]), 0.0).astype(jnp.bfloat16)
    h = jnp.maximum(lin(h, p["w2"], p["b2"]), 0.0).astype(jnp.bfloat16)
    h = jnp.maximum(lin(h, p["w3"], p["b3"]), 0.0).astype(jnp.bfloat16)
    return lin(h, p["wo"], p["bo"])


if __name__ == "__main__":
    # Small shapes consistent with the module's interface.
    B = 16
    VISION_DIM, AUDIO_DIM, INTERO_DIM = 32, 64, 32   # fusion_in = 128
    HIDDEN_DIM, OUTPUT_DIM = 256, 128
    NUM_LAYERS = 4  # -> 3 hidden (Linear+ReLU) blocks + output Linear

    key = jax.random.PRNGKey(0)
    k_v, k_a, k_i, k_p = jax.random.split(key, 4)
    vision = jax.random.normal(k_v, (B, VISION_DIM), jnp.float32)
    audio = jax.random.normal(k_a, (B, AUDIO_DIM), jnp.float32)
    intero = jax.random.normal(k_i, (B, INTERO_DIM), jnp.float32)

    # Non-trivial modality weights (one negative to exercise relu on the scale).
    params = init_params(k_p, VISION_DIM, AUDIO_DIM, INTERO_DIM,
                         HIDDEN_DIM, OUTPUT_DIM)
    params["modality_scale"] = jnp.array([0.7, 1.3, -0.5], jnp.float32)

    # Default batch_tile=256 >= B -> single full-batch grid step (tb = B = 16),
    # per the perf review: no tiny multi-step grid at demo scale.
    out = default_mode_network(vision, audio, intero, params)
    out = jax.block_until_ready(out)

    ref = reference(vision, audio, intero, params)
    assert out.shape == (B, OUTPUT_DIM), out.shape
    max_err = float(jnp.max(jnp.abs(out - ref)))
    assert jnp.allclose(out, ref, atol=1e-2, rtol=1e-2), max_err

    print("KERNEL_OK")
</pallas_src>

<mosaic_0001>
module attributes {stable_mosaic.version = 11 : i64} {
  func.func @dmn_kernel(%arg0: i32, %arg1: memref<3xf32, #tpu.memory_space<smem>>, %arg2: memref<16x128xf32, #tpu.memory_space<vmem>>, %arg3: memref<128x256xbf16, #tpu.memory_space<vmem>>, %arg4: memref<1x256xf32, #tpu.memory_space<vmem>>, %arg5: memref<256x256xbf16, #tpu.memory_space<vmem>>, %arg6: memref<1x256xf32, #tpu.memory_space<vmem>>, %arg7: memref<256x256xbf16, #tpu.memory_space<vmem>>, %arg8: memref<1x256xf32, #tpu.memory_space<vmem>>, %arg9: memref<256x256xbf16, #tpu.memory_space<vmem>>, %arg10: memref<1x256xf32, #tpu.memory_space<vmem>>, %arg11: memref<256x128xbf16, #tpu.memory_space<vmem>>, %arg12: memref<1x128xf32, #tpu.memory_space<vmem>>, %arg13: memref<16x128xf32, #tpu.memory_space<vmem>>) attributes {dimension_semantics = [#tpu.dimension_semantics<parallel>], iteration_bounds = array<i64: 1>, scalar_prefetch = 1 : i64, scratch_operands = 0 : i64, tpu.core_type = #tpu.core_type<tc>, window_params = [{transform_indices = @transform_0, window_bounds = array<i64: 16, 128>}, {pipeline_mode = #tpu.pipeline_mode<synchronous>, transform_indices = @transform_1, window_bounds = array<i64: 128, 256>}, {pipeline_mode = #tpu.pipeline_mode<synchronous>, transform_indices = @transform_2, window_bounds = array<i64: 1, 256>}, {pipeline_mode = #tpu.pipeline_mode<synchronous>, transform_indices = @transform_3, window_bounds = array<i64: 256, 256>}, {pipeline_mode = #tpu.pipeline_mode<synchronous>, transform_indices = @transform_4, window_bounds = array<i64: 1, 256>}, {pipeline_mode = #tpu.pipeline_mode<synchronous>, transform_indices = @transform_5, window_bounds = array<i64: 256, 256>}, {pipeline_mode = #tpu.pipeline_mode<synchronous>, transform_indices = @transform_6, window_bounds = array<i64: 1, 256>}, {pipeline_mode = #tpu.pipeline_mode<synchronous>, transform_indices = @transform_7, window_bounds = array<i64: 256, 256>}, {pipeline_mode = #tpu.pipeline_mode<synchronous>, transform_indices = @transform_8, window_bounds = array<i64: 1, 256>}, {pipeline_mode = #tpu.pipeline_mode<synchronous>, transform_indices = @transform_9, window_bounds = array<i64: 256, 128>}, {pipeline_mode = #tpu.pipeline_mode<synchronous>, transform_indices = @transform_10, window_bounds = array<i64: 1, 128>}, {transform_indices = @transform_11, window_bounds = array<i64: 16, 128>}]} {
    %c0 = arith.constant 0 : index
    %0 = memref.load %arg1[%c0] : memref<3xf32, #tpu.memory_space<smem>>
    %cst = arith.constant 0.000000e+00 : f32
    %1 = arith.maximumf %0, %cst : f32
    %c1 = arith.constant 1 : index
    %2 = memref.load %arg1[%c1] : memref<3xf32, #tpu.memory_space<smem>>
    %cst_0 = arith.constant 0.000000e+00 : f32
    %3 = arith.maximumf %2, %cst_0 : f32
    %c2 = arith.constant 2 : index
    %4 = memref.load %arg1[%c2] : memref<3xf32, #tpu.memory_space<smem>>
    %cst_1 = arith.constant 0.000000e+00 : f32
    %5 = arith.maximumf %4, %cst_1 : f32
    %6 = tpu.iota {dimensions = array<i32: 1>} : vector<1x128xi32>
    %c32_i32 = arith.constant 32 : i32
    %7 = vector.broadcast %c32_i32 : i32 to vector<1x128xi32>
    %8 = arith.cmpi slt, %6, %7 : vector<1x128xi32>
    %c96_i32 = arith.constant 96 : i32
    %9 = vector.broadcast %c96_i32 : i32 to vector<1x128xi32>
    %10 = arith.cmpi slt, %6, %9 : vector<1x128xi32>
    %11 = vector.broadcast %3 : f32 to vector<1x128xf32>
    %12 = vector.broadcast %5 : f32 to vector<1x128xf32>
    %13 = arith.select %10, %11, %12 : vector<1x128xi1>, vector<1x128xf32>
    %14 = vector.broadcast %1 : f32 to vector<1x128xf32>
    %15 = arith.select %8, %14, %13 : vector<1x128xi1>, vector<1x128xf32>
    %c0_2 = arith.constant 0 : index
    %c0_3 = arith.constant 0 : index
    %16 = vector.load %arg2[%c0_2, %c0_3] : memref<16x128xf32, #tpu.memory_space<vmem>>, vector<16x128xf32>
    %17 = vector.broadcast %15 : vector<1x128xf32> to vector<16x128xf32>
    %18 = arith.mulf %16, %17 : vector<16x128xf32>
    %19 = arith.truncf %18 : vector<16x128xf32> to vector<16x128xbf16>
    %c0_4 = arith.constant 0 : index
    %c0_5 = arith.constant 0 : index
    %20 = vector.load %arg3[%c0_4, %c0_5] : memref<128x256xbf16, #tpu.memory_space<vmem>>, vector<128x256xbf16>
    %cst_6 = arith.constant dense<0.000000e+00> : vector<16x256xf32>
    %21 = tpu.matmul %19, %20, %cst_6 {dimension_numbers = #tpu.dot_dimension_numbers<[1], [0], [0], [1], [0, 0, 1, 1], [], []>} : vector<16x128xbf16>, vector<128x256xbf16>, vector<16x256xf32> -> vector<16x256xf32>
    %c0_7 = arith.constant 0 : index
    %c0_8 = arith.constant 0 : index
    %22 = vector.load %arg4[%c0_7, %c0_8] : memref<1x256xf32, #tpu.memory_space<vmem>>, vector<1x256xf32>
    %23 = vector.broadcast %22 : vector<1x256xf32> to vector<16x256xf32>
    %24 = arith.addf %21, %23 : vector<16x256xf32>
    %25 = math.tanh %24 : vector<16x256xf32>
    %26 = arith.truncf %25 : vector<16x256xf32> to vector<16x256xbf16>
    %c0_9 = arith.constant 0 : index
    %c0_10 = arith.constant 0 : index
    %27 = vector.load %arg5[%c0_9, %c0_10] : memref<256x256xbf16, #tpu.memory_space<vmem>>, vector<256x256xbf16>
    %cst_11 = arith.constant dense<0.000000e+00> : vector<16x256xf32>
    %28 = tpu.matmul %26, %27, %cst_11 {dimension_numbers = #tpu.dot_dimension_numbers<[1], [0], [0], [1], [0, 0, 1, 1], [], []>} : vector<16x256xbf16>, vector<256x256xbf16>, vector<16x256xf32> -> vector<16x256xf32>
    %c0_12 = arith.constant 0 : index
    %c0_13 = arith.constant 0 : index
    %29 = vector.load %arg6[%c0_12, %c0_13] : memref<1x256xf32, #tpu.memory_space<vmem>>, vector<1x256xf32>
    %30 = vector.broadcast %29 : vector<1x256xf32> to vector<16x256xf32>
    %31 = arith.addf %28, %30 : vector<16x256xf32>
    %cst_14 = arith.constant 0.000000e+00 : f32
    %32 = vector.broadcast %cst_14 : f32 to vector<16x256xf32>
    %33 = arith.maximumf %31, %32 : vector<16x256xf32>
    %34 = arith.truncf %33 : vector<16x256xf32> to vector<16x256xbf16>
    %c0_15 = arith.constant 0 : index
    %c0_16 = arith.constant 0 : index
    %35 = vector.load %arg7[%c0_15, %c0_16] : memref<256x256xbf16, #tpu.memory_space<vmem>>, vector<256x256xbf16>
    %cst_17 = arith.constant dense<0.000000e+00> : vector<16x256xf32>
    %36 = tpu.matmul %34, %35, %cst_17 {dimension_numbers = #tpu.dot_dimension_numbers<[1], [0], [0], [1], [0, 0, 1, 1], [], []>} : vector<16x256xbf16>, vector<256x256xbf16>, vector<16x256xf32> -> vector<16x256xf32>
    %c0_18 = arith.constant 0 : index
    %c0_19 = arith.constant 0 : index
    %37 = vector.load %arg8[%c0_18, %c0_19] : memref<1x256xf32, #tpu.memory_space<vmem>>, vector<1x256xf32>
    %38 = vector.broadcast %37 : vector<1x256xf32> to vector<16x256xf32>
    %39 = arith.addf %36, %38 : vector<16x256xf32>
    %cst_20 = arith.constant 0.000000e+00 : f32
    %40 = vector.broadcast %cst_20 : f32 to vector<16x256xf32>
    %41 = arith.maximumf %39, %40 : vector<16x256xf32>
    %42 = arith.truncf %41 : vector<16x256xf32> to vector<16x256xbf16>
    %c0_21 = arith.constant 0 : index
    %c0_22 = arith.constant 0 : index
    %43 = vector.load %arg9[%c0_21, %c0_22] : memref<256x256xbf16, #tpu.memory_space<vmem>>, vector<256x256xbf16>
    %cst_23 = arith.constant dense<0.000000e+00> : vector<16x256xf32>
    %44 = tpu.matmul %42, %43, %cst_23 {dimension_numbers = #tpu.dot_dimension_numbers<[1], [0], [0], [1], [0, 0, 1, 1], [], []>} : vector<16x256xbf16>, vector<256x256xbf16>, vector<16x256xf32> -> vector<16x256xf32>
    %c0_24 = arith.constant 0 : index
    %c0_25 = arith.constant 0 : index
    %45 = vector.load %arg10[%c0_24, %c0_25] : memref<1x256xf32, #tpu.memory_space<vmem>>, vector<1x256xf32>
    %46 = vector.broadcast %45 : vector<1x256xf32> to vector<16x256xf32>
    %47 = arith.addf %44, %46 : vector<16x256xf32>
    %cst_26 = arith.constant 0.000000e+00 : f32
    %48 = vector.broadcast %cst_26 : f32 to vector<16x256xf32>
    %49 = arith.maximumf %47, %48 : vector<16x256xf32>
    %50 = arith.truncf %49 : vector<16x256xf32> to vector<16x256xbf16>
    %c0_27 = arith.constant 0 : index
    %c0_28 = arith.constant 0 : index
    %51 = vector.load %arg11[%c0_27, %c0_28] : memref<256x128xbf16, #tpu.memory_space<vmem>>, vector<256x128xbf16>
    %cst_29 = arith.constant dense<0.000000e+00> : vector<16x128xf32>
    %52 = tpu.matmul %50, %51, %cst_29 {dimension_numbers = #tpu.dot_dimension_numbers<[1], [0], [0], [1], [0, 0, 1, 1], [], []>} : vector<16x256xbf16>, vector<256x128xbf16>, vector<16x128xf32> -> vector<16x128xf32>
    %c0_30 = arith.constant 0 : index
    %c0_31 = arith.constant 0 : index
    %53 = vector.load %arg12[%c0_30, %c0_31] : memref<1x128xf32, #tpu.memory_space<vmem>>, vector<1x128xf32>
    %54 = vector.broadcast %53 : vector<1x128xf32> to vector<16x128xf32>
    %55 = arith.addf %52, %54 : vector<16x128xf32>
    %c0_32 = arith.constant 0 : index
    %c0_33 = arith.constant 0 : index
    %56 = vector.load %arg13[%c0_32, %c0_33] : memref<16x128xf32, #tpu.memory_space<vmem>>, vector<16x128xf32>
    tpu.vector_store %arg13[%c0_32, %c0_33], %55 {strides = array<i32>} : memref<16x128xf32, #tpu.memory_space<vmem>>, vector<16x128xf32>,
    return
  }
  func.func @transform_0(%arg0: i32, %arg1: memref<3xf32, #tpu.memory_space<smem>>) -> (i32, i32) {
    %c0_i32 = arith.constant 0 : i32
    %c0_i32_0 = arith.constant 0 : i32
    return %arg0, %c0_i32 : i32, i32
  }
  func.func @transform_1(%arg0: i32, %arg1: memref<3xf32, #tpu.memory_space<smem>>) -> (i32, i32) {
    %c0_i32 = arith.constant 0 : i32
    %c0_i32_0 = arith.constant 0 : i32
    %c0_i32_1 = arith.constant 0 : i32
    return %c0_i32, %c0_i32_0 : i32, i32
  }
  func.func @transform_2(%arg0: i32, %arg1: memref<3xf32, #tpu.memory_space<smem>>) -> (i32, i32) {
    %c0_i32 = arith.constant 0 : i32
    %c0_i32_0 = arith.constant 0 : i32
    %c0_i32_1 = arith.constant 0 : i32
    return %c0_i32, %c0_i32_0 : i32, i32
  }
  func.func @transform_3(%arg0: i32, %arg1: memref<3xf32, #tpu.memory_space<smem>>) -> (i32, i32) {
    %c0_i32 = arith.constant 0 : i32
    %c0_i32_0 = arith.constant 0 : i32
    %c0_i32_1 = arith.constant 0 : i32
    return %c0_i32, %c0_i32_0 : i32, i32
  }
  func.func @transform_4(%arg0: i32, %arg1: memref<3xf32, #tpu.memory_space<smem>>) -> (i32, i32) {
    %c0_i32 = arith.constant 0 : i32
    %c0_i32_0 = arith.constant 0 : i32
    %c0_i32_1 = arith.constant 0 : i32
    return %c0_i32, %c0_i32_0 : i32, i32
  }
  func.func @transform_5(%arg0: i32, %arg1: memref<3xf32, #tpu.memory_space<smem>>) -> (i32, i32) {
    %c0_i32 = arith.constant 0 : i32
    %c0_i32_0 = arith.constant 0 : i32
    %c0_i32_1 = arith.constant 0 : i32
    return %c0_i32, %c0_i32_0 : i32, i32
  }
  func.func @transform_6(%arg0: i32, %arg1: memref<3xf32, #tpu.memory_space<smem>>) -> (i32, i32) {
    %c0_i32 = arith.constant 0 : i32
    %c0_i32_0 = arith.constant 0 : i32
    %c0_i32_1 = arith.constant 0 : i32
    return %c0_i32, %c0_i32_0 : i32, i32
  }
  func.func @transform_7(%arg0: i32, %arg1: memref<3xf32, #tpu.memory_space<smem>>) -> (i32, i32) {
    %c0_i32 = arith.constant 0 : i32
    %c0_i32_0 = arith.constant 0 : i32
    %c0_i32_1 = arith.constant 0 : i32
    return %c0_i32, %c0_i32_0 : i32, i32
  }
  func.func @transform_8(%arg0: i32, %arg1: memref<3xf32, #tpu.memory_space<smem>>) -> (i32, i32) {
    %c0_i32 = arith.constant 0 : i32
    %c0_i32_0 = arith.constant 0 : i32
    %c0_i32_1 = arith.constant 0 : i32
    return %c0_i32, %c0_i32_0 : i32, i32
  }
  func.func @transform_9(%arg0: i32, %arg1: memref<3xf32, #tpu.memory_space<smem>>) -> (i32, i32) {
    %c0_i32 = arith.constant 0 : i32
    %c0_i32_0 = arith.constant 0 : i32
    %c0_i32_1 = arith.constant 0 : i32
    return %c0_i32, %c0_i32_0 : i32, i32
  }
  func.func @transform_10(%arg0: i32, %arg1: memref<3xf32, #tpu.memory_space<smem>>) -> (i32, i32) {
    %c0_i32 = arith.constant 0 : i32
    %c0_i32_0 = arith.constant 0 : i32
    %c0_i32_1 = arith.constant 0 : i32
    return %c0_i32, %c0_i32_0 : i32, i32
  }
  func.func @transform_11(%arg0: i32, %arg1: memref<3xf32, #tpu.memory_space<smem>>) -> (i32, i32) {
    %c0_i32 = arith.constant 0 : i32
    %c0_i32_0 = arith.constant 0 : i32
    return %arg0, %c0_i32 : i32, i32
  }
}

module attributes {stable_mosaic.version = 11 : i64} {
  func.func @dmn_kernel(%arg0: i32, %arg1: memref<3xf32, #tpu.memory_space<smem>>, %arg2: memref<16x128xf32, #tpu.memory_space<vmem>>, %arg3: memref<128x256xbf16, #tpu.memory_space<vmem>>, %arg4: memref<1x256xf32, #tpu.memory_space<vmem>>, %arg5: memref<256x256xbf16, #tpu.memory_space<vmem>>, %arg6: memref<1x256xf32, #tpu.memory_space<vmem>>, %arg7: memref<256x256xbf16, #tpu.memory_space<vmem>>, %arg8: memref<1x256xf32, #tpu.memory_space<vmem>>, %arg9: memref<256x256xbf16, #tpu.memory_space<vmem>>, %arg10: memref<1x256xf32, #tpu.memory_space<vmem>>, %arg11: memref<256x128xbf16, #tpu.memory_space<vmem>>, %arg12: memref<1x128xf32, #tpu.memory_space<vmem>>, %arg13: memref<16x128xf32, #tpu.memory_space<vmem>>) attributes {dimension_semantics = [#tpu.dimension_semantics<parallel>], iteration_bounds = array<i64: 1>, scalar_prefetch = 1 : i64, scratch_operands = 0 : i64, tpu.core_type = #tpu.core_type<tc>, window_params = [{transform_indices = @transform_0, window_bounds = array<i64: 16, 128>}, {pipeline_mode = #tpu.pipeline_mode<synchronous>, transform_indices = @transform_1, window_bounds = array<i64: 128, 256>}, {pipeline_mode = #tpu.pipeline_mode<synchronous>, transform_indices = @transform_2, window_bounds = array<i64: 1, 256>}, {pipeline_mode = #tpu.pipeline_mode<synchronous>, transform_indices = @transform_3, window_bounds = array<i64: 256, 256>}, {pipeline_mode = #tpu.pipeline_mode<synchronous>, transform_indices = @transform_4, window_bounds = array<i64: 1, 256>}, {pipeline_mode = #tpu.pipeline_mode<synchronous>, transform_indices = @transform_5, window_bounds = array<i64: 256, 256>}, {pipeline_mode = #tpu.pipeline_mode<synchronous>, transform_indices = @transform_6, window_bounds = array<i64: 1, 256>}, {pipeline_mode = #tpu.pipeline_mode<synchronous>, transform_indices = @transform_7, window_bounds = array<i64: 256, 256>}, {pipeline_mode = #tpu.pipeline_mode<synchronous>, transform_indices = @transform_8, window_bounds = array<i64: 1, 256>}, {pipeline_mode = #tpu.pipeline_mode<synchronous>, transform_indices = @transform_9, window_bounds = array<i64: 256, 128>}, {pipeline_mode = #tpu.pipeline_mode<synchronous>, transform_indices = @transform_10, window_bounds = array<i64: 1, 128>}, {transform_indices = @transform_11, window_bounds = array<i64: 16, 128>}]} {
    %c0 = arith.constant 0 : index
    %0 = memref.load %arg1[%c0] : memref<3xf32, #tpu.memory_space<smem>>
    %cst = arith.constant 0.000000e+00 : f32
    %1 = arith.maximumf %0, %cst : f32
    %c1 = arith.constant 1 : index
    %2 = memref.load %arg1[%c1] : memref<3xf32, #tpu.memory_space<smem>>
    %cst_0 = arith.constant 0.000000e+00 : f32
    %3 = arith.maximumf %2, %cst_0 : f32
    %c2 = arith.constant 2 : index
    %4 = memref.load %arg1[%c2] : memref<3xf32, #tpu.memory_space<smem>>
    %cst_1 = arith.constant 0.000000e+00 : f32
    %5 = arith.maximumf %4, %cst_1 : f32
    %6 = tpu.iota {dimensions = array<i32: 1>} : vector<1x128xi32>
    %c32_i32 = arith.constant 32 : i32
    %7 = vector.broadcast %c32_i32 : i32 to vector<1x128xi32>
    %8 = arith.cmpi slt, %6, %7 : vector<1x128xi32>
    %c96_i32 = arith.constant 96 : i32
    %9 = vector.broadcast %c96_i32 : i32 to vector<1x128xi32>
    %10 = arith.cmpi slt, %6, %9 : vector<1x128xi32>
    %11 = vector.broadcast %3 : f32 to vector<1x128xf32>
    %12 = vector.broadcast %5 : f32 to vector<1x128xf32>
    %13 = arith.select %10, %11, %12 : vector<1x128xi1>, vector<1x128xf32>
    %14 = vector.broadcast %1 : f32 to vector<1x128xf32>
    %15 = arith.select %8, %14, %13 : vector<1x128xi1>, vector<1x128xf32>
    %c0_2 = arith.constant 0 : index
    %c0_3 = arith.constant 0 : index
    %16 = vector.load %arg2[%c0_2, %c0_3] : memref<16x128xf32, #tpu.memory_space<vmem>>, vector<16x128xf32>
    %17 = vector.broadcast %15 : vector<1x128xf32> to vector<16x128xf32>
    %18 = arith.mulf %16, %17 : vector<16x128xf32>
    %19 = arith.truncf %18 : vector<16x128xf32> to vector<16x128xbf16>
    %c0_4 = arith.constant 0 : index
    %c0_5 = arith.constant 0 : index
    %20 = vector.load %arg3[%c0_4, %c0_5] : memref<128x256xbf16, #tpu.memory_space<vmem>>, vector<128x256xbf16>
    %cst_6 = arith.constant dense<0.000000e+00> : vector<16x256xf32>
    %21 = tpu.matmul %19, %20, %cst_6 {dimension_numbers = #tpu.dot_dimension_numbers<[1], [0], [0], [1], [0, 0, 1, 1], [], []>} : vector<16x128xbf16>, vector<128x256xbf16>, vector<16x256xf32> -> vector<16x256xf32>
    %c0_7 = arith.constant 0 : index
    %c0_8 = arith.constant 0 : index
    %22 = vector.load %arg4[%c0_7, %c0_8] : memref<1x256xf32, #tpu.memory_space<vmem>>, vector<1x256xf32>
    %23 = vector.broadcast %22 : vector<1x256xf32> to vector<16x256xf32>
    %24 = arith.addf %21, %23 : vector<16x256xf32>
    %25 = math.tanh %24 : vector<16x256xf32>
    %26 = arith.truncf %25 : vector<16x256xf32> to vector<16x256xbf16>
    %c0_9 = arith.constant 0 : index
    %c0_10 = arith.constant 0 : index
    %27 = vector.load %arg5[%c0_9, %c0_10] : memref<256x256xbf16, #tpu.memory_space<vmem>>, vector<256x256xbf16>
    %cst_11 = arith.constant dense<0.000000e+00> : vector<16x256xf32>
    %28 = tpu.matmul %26, %27, %cst_11 {dimension_numbers = #tpu.dot_dimension_numbers<[1], [0], [0], [1], [0, 0, 1, 1], [], []>} : vector<16x256xbf16>, vector<256x256xbf16>, vector<16x256xf32> -> vector<16x256xf32>
    %c0_12 = arith.constant 0 : index
    %c0_13 = arith.constant 0 : index
    %29 = vector.load %arg6[%c0_12, %c0_13] : memref<1x256xf32, #tpu.memory_space<vmem>>, vector<1x256xf32>
    %30 = vector.broadcast %29 : vector<1x256xf32> to vector<16x256xf32>
    %31 = arith.addf %28, %30 : vector<16x256xf32>
    %cst_14 = arith.constant 0.000000e+00 : f32
    %32 = vector.broadcast %cst_14 : f32 to vector<16x256xf32>
    %33 = arith.maximumf %31, %32 : vector<16x256xf32>
    %34 = arith.truncf %33 : vector<16x256xf32> to vector<16x256xbf16>
    %c0_15 = arith.constant 0 : index
    %c0_16 = arith.constant 0 : index
    %35 = vector.load %arg7[%c0_15, %c0_16] : memref<256x256xbf16, #tpu.memory_space<vmem>>, vector<256x256xbf16>
    %cst_17 = arith.constant dense<0.000000e+00> : vector<16x256xf32>
    %36 = tpu.matmul %34, %35, %cst_17 {dimension_numbers = #tpu.dot_dimension_numbers<[1], [0], [0], [1], [0, 0, 1, 1], [], []>} : vector<16x256xbf16>, vector<256x256xbf16>, vector<16x256xf32> -> vector<16x256xf32>
    %c0_18 = arith.constant 0 : index
    %c0_19 = arith.constant 0 : index
    %37 = vector.load %arg8[%c0_18, %c0_19] : memref<1x256xf32, #tpu.memory_space<vmem>>, vector<1x256xf32>
    %38 = vector.broadcast %37 : vector<1x256xf32> to vector<16x256xf32>
    %39 = arith.addf %36, %38 : vector<16x256xf32>
    %cst_20 = arith.constant 0.000000e+00 : f32
    %40 = vector.broadcast %cst_20 : f32 to vector<16x256xf32>
    %41 = arith.maximumf %39, %40 : vector<16x256xf32>
    %42 = arith.truncf %41 : vector<16x256xf32> to vector<16x256xbf16>
    %c0_21 = arith.constant 0 : index
    %c0_22 = arith.constant 0 : index
    %43 = vector.load %arg9[%c0_21, %c0_22] : memref<256x256xbf16, #tpu.memory_space<vmem>>, vector<256x256xbf16>
    %cst_23 = arith.constant dense<0.000000e+00> : vector<16x256xf32>
    %44 = tpu.matmul %42, %43, %cst_23 {dimension_numbers = #tpu.dot_dimension_numbers<[1], [0], [0], [1], [0, 0, 1, 1], [], []>} : vector<16x256xbf16>, vector<256x256xbf16>, vector<16x256xf32> -> vector<16x256xf32>
    %c0_24 = arith.constant 0 : index
    %c0_25 = arith.constant 0 : index
    %45 = vector.load %arg10[%c0_24, %c0_25] : memref<1x256xf32, #tpu.memory_space<vmem>>, vector<1x256xf32>
    %46 = vector.broadcast %45 : vector<1x256xf32> to vector<16x256xf32>
    %47 = arith.addf %44, %46 : vector<16x256xf32>
    %cst_26 = arith.constant 0.000000e+00 : f32
    %48 = vector.broadcast %cst_26 : f32 to vector<16x256xf32>
    %49 = arith.maximumf %47, %48 : vector<16x256xf32>
    %50 = arith.truncf %49 : vector<16x256xf32> to vector<16x256xbf16>
    %c0_27 = arith.constant 0 : index
    %c0_28 = arith.constant 0 : index
    %51 = vector.load %arg11[%c0_27, %c0_28] : memref<256x128xbf16, #tpu.memory_space<vmem>>, vector<256x128xbf16>
    %cst_29 = arith.constant dense<0.000000e+00> : vector<16x128xf32>
    %52 = tpu.matmul %50, %51, %cst_29 {dimension_numbers = #tpu.dot_dimension_numbers<[1], [0], [0], [1], [0, 0, 1, 1], [], []>} : vector<16x256xbf16>, vector<256x128xbf16>, vector<16x128xf32> -> vector<16x128xf32>
    %c0_30 = arith.constant 0 : index
    %c0_31 = arith.constant 0 : index
    %53 = vector.load %arg12[%c0_30, %c0_31] : memref<1x128xf32, #tpu.memory_space<vmem>>, vector<1x128xf32>
    %54 = vector.broadcast %53 : vector<1x128xf32> to vector<16x128xf32>
    %55 = arith.addf %52, %54 : vector<16x128xf32>
    %c0_32 = arith.constant 0 : index
    %c0_33 = arith.constant 0 : index
    %56 = vector.load %arg13[%c0_32, %c0_33] : memref<16x128xf32, #tpu.memory_space<vmem>>, vector<16x128xf32>
    tpu.vector_store %arg13[%c0_32, %c0_33], %55 {strides = array<i32>} : memref<16x128xf32, #tpu.memory_space<vmem>>, vector<16x128xf32>,
    return
  }
  func.func @transform_0(%arg0: i32, %arg1: memref<3xf32, #tpu.memory_space<smem>>) -> (i32, i32) {
    %c0_i32 = arith.constant 0 : i32
    %c0_i32_0 = arith.constant 0 : i32
    return %arg0, %c0_i32 : i32, i32
  }
  func.func @transform_1(%arg0: i32, %arg1: memref<3xf32, #tpu.memory_space<smem>>) -> (i32, i32) {
    %c0_i32 = arith.constant 0 : i32
    %c0_i32_0 = arith.constant 0 : i32
    %c0_i32_1 = arith.constant 0 : i32
    return %c0_i32, %c0_i32_0 : i32, i32
  }
  func.func @transform_2(%arg0: i32, %arg1: memref<3xf32, #tpu.memory_space<smem>>) -> (i32, i32) {
    %c0_i32 = arith.constant 0 : i32
    %c0_i32_0 = arith.constant 0 : i32
    %c0_i32_1 = arith.constant 0 : i32
    return %c0_i32, %c0_i32_0 : i32, i32
  }
  func.func @transform_3(%arg0: i32, %arg1: memref<3xf32, #tpu.memory_space<smem>>) -> (i32, i32) {
    %c0_i32 = arith.constant 0 : i32
    %c0_i32_0 = arith.constant 0 : i32
    %c0_i32_1 = arith.constant 0 : i32
    return %c0_i32, %c0_i32_0 : i32, i32
  }
  func.func @transform_4(%arg0: i32, %arg1: memref<3xf32, #tpu.memory_space<smem>>) -> (i32, i32) {
    %c0_i32 = arith.constant 0 : i32
    %c0_i32_0 = arith.constant 0 : i32
    %c0_i32_1 = arith.constant 0 : i32
    return %c0_i32, %c0_i32_0 : i32, i32
  }
  func.func @transform_5(%arg0: i32, %arg1: memref<3xf32, #tpu.memory_space<smem>>) -> (i32, i32) {
    %c0_i32 = arith.constant 0 : i32
    %c0_i32_0 = arith.constant 0 : i32
    %c0_i32_1 = arith.constant 0 : i32
    return %c0_i32, %c0_i32_0 : i32, i32
  }
  func.func @transform_6(%arg0: i32, %arg1: memref<3xf32, #tpu.memory_space<smem>>) -> (i32, i32) {
    %c0_i32 = arith.constant 0 : i32
    %c0_i32_0 = arith.constant 0 : i32
    %c0_i32_1 = arith.constant 0 : i32
    return %c0_i32, %c0_i32_0 : i32, i32
  }
  func.func @transform_7(%arg0: i32, %arg1: memref<3xf32, #tpu.memory_space<smem>>) -> (i32, i32) {
    %c0_i32 = arith.constant 0 : i32
    %c0_i32_0 = arith.constant 0 : i32
    %c0_i32_1 = arith.constant 0 : i32
    return %c0_i32, %c0_i32_0 : i32, i32
  }
  func.func @transform_8(%arg0: i32, %arg1: memref<3xf32, #tpu.memory_space<smem>>) -> (i32, i32) {
    %c0_i32 = arith.constant 0 : i32
    %c0_i32_0 = arith.constant 0 : i32
    %c0_i32_1 = arith.constant 0 : i32
    return %c0_i32, %c0_i32_0 : i32, i32
  }
  func.func @transform_9(%arg0: i32, %arg1: memref<3xf32, #tpu.memory_space<smem>>) -> (i32, i32) {
    %c0_i32 = arith.constant 0 : i32
    %c0_i32_0 = arith.constant 0 : i32
    %c0_i32_1 = arith.constant 0 : i32
    return %c0_i32, %c0_i32_0 : i32, i32
  }
  func.func @transform_10(%arg0: i32, %arg1: memref<3xf32, #tpu.memory_space<smem>>) -> (i32, i32) {
    %c0_i32 = arith.constant 0 : i32
    %c0_i32_0 = arith.constant 0 : i32
    %c0_i32_1 = arith.constant 0 : i32
    return %c0_i32, %c0_i32_0 : i32, i32
  }
  func.func @transform_11(%arg0: i32, %arg1: memref<3xf32, #tpu.memory_space<smem>>) -> (i32, i32) {
    %c0_i32 = arith.constant 0 : i32
    %c0_i32_0 = arith.constant 0 : i32
    return %arg0, %c0_i32 : i32, i32
  }
}

</mosaic_0001>

<llo_original>
// kernel: tpu_custom_call.1
$region0: #{tpu_custom_call.1}
  #allocation0 [shape = 'u32[]', space=smem, size = 0x4, offset = 0x4, fixed_abs, tag = 'smem constant byte address 0x4 - core index']
  #allocation1 [shape = 'u32[144,128]{1,0:T(1,128)}', space=vmem, size = 0x12000, scoped, tag = 'internal scratch']
  #allocation2 [shape = 's32[1]{0}', space=sflag, size = 0x4, scoped, tag = 'scoped memory for tpu_custom_call.1']
  #allocation3 [shape = 'u8[512]{0}', space=smem, size = 0x200, scoped, tag = 'prefetched SMEM operand 0']
  %s0 = inlined_call_operand.hbm [shape: f32[3], index: 0, kind: input, shape index: {}]
  %s1 = inlined_call_operand.hbm [shape: f32[16,128], index: 1, kind: input, shape index: {}]
  %s2 = inlined_call_operand.hbm [shape: bf16[128,256], index: 2, kind: input, shape index: {}]
  %s3 = inlined_call_operand.vmem [shape: f32[1,256], index: 3, kind: input, shape index: {}]
  %s4 = inlined_call_operand.hbm [shape: bf16[256,256], index: 4, kind: input, shape index: {}]
  %s5 = inlined_call_operand.vmem [shape: f32[1,256], index: 5, kind: input, shape index: {}]
  %s6 = inlined_call_operand.hbm [shape: bf16[256,256], index: 6, kind: input, shape index: {}]
  %s7 = inlined_call_operand.vmem [shape: f32[1,256], index: 7, kind: input, shape index: {}]
  %s8 = inlined_call_operand.hbm [shape: bf16[256,256], index: 8, kind: input, shape index: {}]
  %s9 = inlined_call_operand.vmem [shape: f32[1,256], index: 9, kind: input, shape index: {}]
  %s10 = inlined_call_operand.hbm [shape: bf16[256,128], index: 10, kind: input, shape index: {}]
  %s11 = inlined_call_operand.vmem [shape: f32[1,128], index: 11, kind: input, shape index: {}]
  %s12 = inlined_call_operand.hbm [shape: f32[16,128], index: 12, kind: output, shape index: {}]
  %s13 = sld [smem:[#allocation0]]
  $region78: #{tpu_custom_call.1} parent=0
    _
  %s15 = ssub.s32 1, %s13
  %s16 = scalar_select 0, %s15, %s13
  %18 = dma.hbm_to_smem %s0, 16, [#allocation3], [#allocation2]
  %19 = dma.done [#allocation2], 16
  %20 = sfence
  $region1: #{tpu_custom_call.1} parent=0
    #allocation4 [shape = 'u8[8192]{0}', space=vmem, size = 0x2000, scoped, tag = 'input window, operand 1, single buffered']
    #allocation5 [shape = 's32[1]{0}', space=sflag, size = 0x4, scoped, tag = 'scoped memory for tpu_custom_call.1']
    #allocation6 [shape = 's32[1]{0}', space=sflag, size = 0x4, scoped, tag = 'scoped memory for tpu_custom_call.1']
    #allocation7 [shape = 'u8[65536]{0}', space=vmem, size = 0x10000, scoped, tag = 'input window, operand 2, single buffered']
    #allocation8 [shape = 's32[1]{0}', space=sflag, size = 0x4, scoped, tag = 'scoped memory for tpu_custom_call.1']
    #allocation9 [shape = 'u8[131072]{0}', space=vmem, size = 0x20000, scoped, tag = 'input window, operand 4, single buffered']
    #allocation10 [shape = 'u8[131072]{0}', space=vmem, size = 0x20000, scoped, tag = 'input window, operand 6, single buffered']
    #allocation11 [shape = 's32[1]{0}', space=sflag, size = 0x4, scoped, tag = 'scoped memory for tpu_custom_call.1']
    #allocation12 [shape = 'u8[131072]{0}', space=vmem, size = 0x20000, scoped, tag = 'input window, operand 8, single buffered']
    #allocation13 [shape = 'u8[65536]{0}', space=vmem, size = 0x10000, scoped, tag = 'input window, operand 10, single buffered']
    #allocation14 [shape = 's32[1]{0}', space=sflag, size = 0x4, scoped, tag = 'scoped memory for tpu_custom_call.1']
    #allocation15 [shape = 'u8[8192]{0}', space=vmem, size = 0x2000, scoped, tag = 'output window, operand 0, single buffered']
    %21 = vsyncpa [#allocation5], 0
    %22 = vsyncpa [#allocation8], 0
    %23 = vsyncpa [#allocation11], 0
    %24 = vsyncpa [#allocation14], 0
    %25 = vsyncpa [#allocation6], 0
    // Predicated region
    $region2: #{tpu_custom_call.1} parent=1 // pred_check
      _
    $region3: #{tpu_custom_call.1} parent=1 // pred_check_branch
      %27 = sbr.rel (0) target = $region5
    $region4: #{tpu_custom_call.1} parent=1 // pred_region
      %s29 = ssub.s32 256, 256
      %30 = vsyncadd [#allocation5], %s29
      %s31 = sshll.u32 [#allocation4], 4
      %s32 = int_to_ptr.vmem [resolvable:$true] %s31
      %37 = dma.hbm_to_vmem [thread:$0]  %s1, 256, %s32, [#allocation5], 128, 128, 8
    $region5: #{tpu_custom_call.1} parent=1 // pred_fallthru
      _
    // Predicated region
    $region6: #{tpu_custom_call.1} parent=1 // pred_check
      _
    $region7: #{tpu_custom_call.1} parent=1 // pred_check_branch
      %39 = sbr.rel (0) target = $region9
    $region8: #{tpu_custom_call.1} parent=1 // pred_region
      %s41 = ssub.s32 2048, 2048
      %42 = vsyncadd [#allocation8], %s41
      %s43 = sshll.u32 [#allocation7], 4
      %s44 = int_to_ptr.vmem [resolvable:$true] %s43
      %49 = dma.hbm_to_vmem [thread:$0]  %s2, 2048, %s44, [#allocation8], 128, 128, 8
    $region9: #{tpu_custom_call.1} parent=1 // pred_fallthru
      _
    // Predicated region
    $region10: #{tpu_custom_call.1} parent=1 // pred_check
      _
    $region11: #{tpu_custom_call.1} parent=1 // pred_check_branch
      %51 = sbr.rel (0) target = $region13
    $region12: #{tpu_custom_call.1} parent=1 // pred_region
      _
    $region13: #{tpu_custom_call.1} parent=1 // pred_fallthru
      _
    // Predicated region
    $region14: #{tpu_custom_call.1} parent=1 // pred_check
      _
    $region15: #{tpu_custom_call.1} parent=1 // pred_check_branch
      %53 = sbr.rel (0) target = $region17
    $region16: #{tpu_custom_call.1} parent=1 // pred_region
      %s55 = ssub.s32 4096, 4096
      %56 = vsyncadd [#allocation8], %s55
      %s57 = sshll.u32 [#allocation9], 4
      %s58 = int_to_ptr.vmem [resolvable:$true] %s57
      %63 = dma.hbm_to_vmem [thread:$0]  %s4, 4096, %s58, [#allocation8], 128, 128, 8
    $region17: #{tpu_custom_call.1} parent=1 // pred_fallthru
      _
    // Predicated region
    $region18: #{tpu_custom_call.1} parent=1 // pred_check
      _
    $region19: #{tpu_custom_call.1} parent=1 // pred_check_branch
      %65 = sbr.rel (0) target = $region21
    $region20: #{tpu_custom_call.1} parent=1 // pred_region
      _
    $region21: #{tpu_custom_call.1} parent=1 // pred_fallthru
      _
    // Predicated region
    $region22: #{tpu_custom_call.1} parent=1 // pred_check
      _
    $region23: #{tpu_custom_call.1} parent=1 // pred_check_branch
      %67 = sbr.rel (0) target = $region25
    $region24: #{tpu_custom_call.1} parent=1 // pred_region
      %s69 = ssub.s32 4096, 4096
      %70 = vsyncadd [#allocation11], %s69
      %s71 = sshll.u32 [#allocation10], 4
      %s72 = int_to_ptr.vmem [resolvable:$true] %s71
      %77 = dma.hbm_to_vmem [thread:$0]  %s6, 4096, %s72, [#allocation11], 128, 128, 8
    $region25: #{tpu_custom_call.1} parent=1 // pred_fallthru
      _
    // Predicated region
    $region26: #{tpu_custom_call.1} parent=1 // pred_check
      _
    $region27: #{tpu_custom_call.1} parent=1 // pred_check_branch
      %79 = sbr.rel (0) target = $region29
    $region28: #{tpu_custom_call.1} parent=1 // pred_region
      _
    $region29: #{tpu_custom_call.1} parent=1 // pred_fallthru
      _
    // Predicated region
    $region30: #{tpu_custom_call.1} parent=1 // pred_check
      _
    $region31: #{tpu_custom_call.1} parent=1 // pred_check_branch
      %81 = sbr.rel (0) target = $region33
    $region32: #{tpu_custom_call.1} parent=1 // pred_region
      %s83 = ssub.s32 4096, 4096
      %84 = vsyncadd [#allocation11], %s83
      %s85 = sshll.u32 [#allocation12], 4
      %s86 = int_to_ptr.vmem [resolvable:$true] %s85
      %91 = dma.hbm_to_vmem [thread:$0]  %s8, 4096, %s86, [#allocation11], 128, 128, 8
    $region33: #{tpu_custom_call.1} parent=1 // pred_fallthru
      _
    // Predicated region
    $region34: #{tpu_custom_call.1} parent=1 // pred_check
      _
    $region35: #{tpu_custom_call.1} parent=1 // pred_check_branch
      %93 = sbr.rel (0) target = $region37
    $region36: #{tpu_custom_call.1} parent=1 // pred_region
      _
    $region37: #{tpu_custom_call.1} parent=1 // pred_fallthru
      _
    // Predicated region
    $region38: #{tpu_custom_call.1} parent=1 // pred_check
      _
    $region39: #{tpu_custom_call.1} parent=1 // pred_check_branch
      %95 = sbr.rel (0) target = $region41
    $region40: #{tpu_custom_call.1} parent=1 // pred_region
      %s97 = ssub.s32 2048, 2048
      %98 = vsyncadd [#allocation14], %s97
      %s99 = sshll.u32 [#allocation13], 4
      %s100 = int_to_ptr.vmem [resolvable:$true] %s99
      %105 = dma.hbm_to_vmem [thread:$0]  %s10, 2048, %s100, [#allocation14], 64, 64, 4
    $region41: #{tpu_custom_call.1} parent=1 // pred_fallthru
      _
    // Predicated region
    $region42: #{tpu_custom_call.1} parent=1 // pred_check
      _
    $region43: #{tpu_custom_call.1} parent=1 // pred_check_branch
      %107 = sbr.rel (0) target = $region45
    $region44: #{tpu_custom_call.1} parent=1 // pred_region
      _
    $region45: #{tpu_custom_call.1} parent=1 // pred_fallthru
      _
    // Predicated region
    $region46: #{tpu_custom_call.1} parent=1 // pred_check
      _
    $region47: #{tpu_custom_call.1} parent=1 // pred_check_branch
      %109 = sbr.rel (0) target = $region49
    $region48: #{tpu_custom_call.1} parent=1 // pred_region
      %110 = dma.done [#allocation5], 256
    $region49: #{tpu_custom_call.1} parent=1 // pred_fallthru
      _
    // Predicated region
    $region50: #{tpu_custom_call.1} parent=1 // pred_check
      _
    $region51: #{tpu_custom_call.1} parent=1 // pred_check_branch
      %112 = sbr.rel (0) target = $region53
    $region52: #{tpu_custom_call.1} parent=1 // pred_region
      %113 = dma.done [#allocation8], 2048
    $region53: #{tpu_custom_call.1} parent=1 // pred_fallthru
      _
    // Predicated region
    $region54: #{tpu_custom_call.1} parent=1 // pred_check
      _
    $region55: #{tpu_custom_call.1} parent=1 // pred_check_branch
      %115 = sbr.rel (0) target = $region57
    $region56: #{tpu_custom_call.1} parent=1 // pred_region
      %116 = dma.done [#allocation8], 4096
    $region57: #{tpu_custom_call.1} parent=1 // pred_fallthru
      _
    // Predicated region
    $region58: #{tpu_custom_call.1} parent=1 // pred_check
      _
    $region59: #{tpu_custom_call.1} parent=1 // pred_check_branch
      %118 = sbr.rel (0) target = $region61
    $region60: #{tpu_custom_call.1} parent=1 // pred_region
      %119 = dma.done [#allocation11], 4096
    $region61: #{tpu_custom_call.1} parent=1 // pred_fallthru
      _
    // Predicated region
    $region62: #{tpu_custom_call.1} parent=1 // pred_check
      _
    $region63: #{tpu_custom_call.1} parent=1 // pred_check_branch
      %121 = sbr.rel (0) target = $region65
    $region64: #{tpu_custom_call.1} parent=1 // pred_region
      %122 = dma.done [#allocation11], 4096
    $region65: #{tpu_custom_call.1} parent=1 // pred_fallthru
      _
    // Predicated region
    $region66: #{tpu_custom_call.1} parent=1 // pred_check
      _
    $region67: #{tpu_custom_call.1} parent=1 // pred_check_branch
      %124 = sbr.rel (0) target = $region69
    $region68: #{tpu_custom_call.1} parent=1 // pred_region
      %125 = dma.done [#allocation14], 2048
    $region69: #{tpu_custom_call.1} parent=1 // pred_fallthru
      _
    %s127 = sld [smem:[#allocation3]]
    %s128 = smax.f32 %s127, 0.0
    %s129 = sld [smem:[#allocation3 + $0x1]]
    %s130 = smax.f32 %s129, 0.0
    %s131 = sld [smem:[#allocation3 + $0x2]]
    %s132 = smax.f32 %s131, 0.0
    %v133 = vlaneseq
    %v134 = vand.u32 %v133, 127
    %vm135 = vcmp.lt.s32.totalorder %v134, 32
    %vm136 = vcmp.lt.s32.totalorder %v134, 96
    %v137 = vstv %s130
    %v138 = vstv %s132
    %v139 = vsel %vm136, %v137, %v138
    %v140 = vstv %s128
    %v141 = vsel %vm135, %v140, %v139
    %v142 = vld [vmem:[#allocation4] sm:$0xff]
    %v143 = vld [vmem:[#allocation4 + $0x8] sm:$0xff]
    %v144 = vmul.f32 %v142, %v141
    %v145 = vmul.f32 %v143, %v141
    %v146 = vpack.c.bf16 %v145, %v144
    %v147 = vld [vmem:[#allocation7] sm:$0xff]
    %v148 = vld [vmem:[#allocation7 + $0x8] sm:$0xff]
    %v149 = vld [vmem:[#allocation7 + $0x10] sm:$0xff]
    %v150 = vld [vmem:[#allocation7 + $0x18] sm:$0xff]
    %v151 = vld [vmem:[#allocation7 + $0x20] sm:$0xff]
    %v152 = vld [vmem:[#allocation7 + $0x28] sm:$0xff]
    %v153 = vld [vmem:[#allocation7 + $0x30] sm:$0xff]
    %v154 = vld [vmem:[#allocation7 + $0x38] sm:$0xff]
    %v155 = vld [vmem:[#allocation7 + $0x40] sm:$0xff]
    %v156 = vld [vmem:[#allocation7 + $0x48] sm:$0xff]
    %v157 = vld [vmem:[#allocation7 + $0x50] sm:$0xff]
    %v158 = vld [vmem:[#allocation7 + $0x58] sm:$0xff]
    %v159 = vld [vmem:[#allocation7 + $0x60] sm:$0xff]
    %v160 = vld [vmem:[#allocation7 + $0x68] sm:$0xff]
    %v161 = vld [vmem:[#allocation7 + $0x70] sm:$0xff]
    %v162 = vld [vmem:[#allocation7 + $0x78] sm:$0xff]
    %v163 = vld [vmem:[%s3] sm:$0x3]
    %v165 = vlaneseq
    %v166 = vshrl.u32 %v165, 7
    %v167 = vsub.s32 0, %v166
    %v168 = vrot.slane %v163, %v167
    %v169 = vlaneseq
    %v170 = vshrl.u32 %v169, 7
    %v171 = vsub.s32 1, %v170
    %v172 = vrot.slane %v163, %v171
    %v191 = vunpack.c.l.b16 %v147
    %v192 = vunpack.c.h.b16 %v147
    %v193 = vunpack.c.l.b16 %v148
    %v194 = vunpack.c.h.b16 %v148
    %v195 = vunpack.c.l.b16 %v149
    %v196 = vunpack.c.h.b16 %v149
    %v197 = vunpack.c.l.b16 %v150
    %v198 = vunpack.c.h.b16 %v150
    %v199 = vunpack.c.l.b16 %v151
    %v200 = vunpack.c.h.b16 %v151
    %v201 = vunpack.c.l.b16 %v152
    %v202 = vunpack.c.h.b16 %v152
    %v203 = vunpack.c.l.b16 %v153
    %v204 = vunpack.c.h.b16 %v153
    %v205 = vunpack.c.l.b16 %v154
    %v206 = vunpack.c.h.b16 %v154
    %v207 = vunpack.c.l.b16 %v155
    %v208 = vunpack.c.h.b16 %v155
    %v209 = vunpack.c.l.b16 %v156
    %v210 = vunpack.c.h.b16 %v156
    %v211 = vunpack.c.l.b16 %v157
    %v212 = vunpack.c.h.b16 %v157
    %v213 = vunpack.c.l.b16 %v158
    %v214 = vunpack.c.h.b16 %v158
    %v215 = vunpack.c.l.b16 %v159
    %v216 = vunpack.c.h.b16 %v159
    %v217 = vunpack.c.l.b16 %v160
    %v218 = vunpack.c.h.b16 %v160
    %v219 = vunpack.c.l.b16 %v161
    %v220 = vunpack.c.h.b16 %v161
    %v221 = vunpack.c.l.b16 %v162
    %v222 = vunpack.c.h.b16 %v162
    %v223 = vpack.c.b16 %v193, %v191
    %v224 = vpack.c.b16 %v194, %v192
    %v225 = vpack.c.b16 %v197, %v195
    %v226 = vpack.c.b16 %v198, %v196
    %v227 = vpack.c.b16 %v201, %v199
    %v228 = vpack.c.b16 %v202, %v200
    %v229 = vpack.c.b16 %v205, %v203
    %v230 = vpack.c.b16 %v206, %v204
    %v231 = vpack.c.b16 %v209, %v207
    %v232 = vpack.c.b16 %v210, %v208
    %v233 = vpack.c.b16 %v213, %v211
    %v234 = vpack.c.b16 %v214, %v212
    %v235 = vpack.c.b16 %v217, %v215
    %v236 = vpack.c.b16 %v218, %v216
    %v237 = vpack.c.b16 %v221, %v219
    %v238 = vpack.c.b16 %v222, %v220
    %255 = vmatprep.subr.bf16.mxu0 %v238
    %256 = vmatpush1.bf16.msra.mxu0 %v237
    %257 = vmatprep.subr.bf16.mxu0 %v236
    %258 = vmatpush1.bf16.msra.mxu0 %v235
    %259 = vmatprep.subr.bf16.mxu0 %v234
    %260 = vmatpush1.bf16.msra.mxu0 %v233
    %261 = vmatprep.subr.bf16.mxu0 %v232
    %262 = vmatpush1.bf16.msra.mxu0 %v231
    %263 = vmatprep.subr.bf16.mxu0 %v230
    %264 = vmatpush1.bf16.msra.mxu0 %v229
    %265 = vmatprep.subr.bf16.mxu0 %v228
    %266 = vmatpush1.bf16.msra.mxu0 %v227
    %267 = vmatprep.subr.bf16.mxu0 %v226
    %268 = vmatpush1.bf16.msra.mxu0 %v225
    %269 = vmatprep.subr.bf16.mxu0 %v224
    %270 = vmatpush1.bf16.msra.mxu0 %v223
    %271 = vmatprep.subr.bf16.mxu0 0
    %272 = vmatpush2.bf16.msra.mxu0 0
    %273 = vmatprep.subr.bf16.mxu0 0
    %274 = vmatpush2.bf16.msra.mxu0 0
    %275 = vmatprep.subr.bf16.mxu0 0
    %276 = vmatpush2.bf16.msra.mxu0 0
    %277 = vmatprep.subr.bf16.mxu0 0
    %278 = vmatpush2.bf16.msra.mxu0 0
    %279 = vmatprep.subr.bf16.mxu0 0
    %280 = vmatpush2.bf16.msra.mxu0 0
    %281 = vmatprep.subr.bf16.mxu0 0
    %282 = vmatpush2.bf16.msra.mxu0 0
    %283 = vmatprep.subr.bf16.mxu0 0
    %284 = vmatpush2.bf16.msra.mxu0 0
    %285 = vmatprep.subr.bf16.mxu0 0
    %286 = vmatpush2.bf16.msra.mxu0 0
    %287 = vmatprep.mubr.bf16.mxu0 0
    %288 = vmatmul.mubr.bf16.gmra.mxu0 %v146
    %v289 = vpop.f32.mrf.mxu0
    %v290 = vadd.f32 %v168, %v289
    %v291 = vpop.f32.mrf.mxu0
    %v292 = vadd.f32 %v172, %v291
    %v293 = vpop.f32.mrf.mxu0
    %v294 = vadd.f32 %v168, %v293
    %v295 = vpop.f32.mrf.mxu0
    %v296 = vadd.f32 %v172, %v295
    %297 = vdwg.mxu0
    %v298 = vtanh.pop %v290
    %v299 = vtanh.pop %v292
    %v300 = vtanh.pop %v294
    %v301 = vtanh.pop %v296
    %v302 = vpack.c.bf16 %v300, %v298
    %v303 = vpack.c.bf16 %v301, %v299
    %v304 = vld [vmem:[#allocation9] sm:$0xff]
    %v305 = vld [vmem:[#allocation9 + $0x8] sm:$0xff]
    %v306 = vld [vmem:[#allocation9 + $0x10] sm:$0xff]
    %v307 = vld [vmem:[#allocation9 + $0x18] sm:$0xff]
    %v308 = vld [vmem:[#allocation9 + $0x20] sm:$0xff]
    %v309 = vld [vmem:[#allocation9 + $0x28] sm:$0xff]
    %v310 = vld [vmem:[#allocation9 + $0x30] sm:$0xff]
    %v311 = vld [vmem:[#allocation9 + $0x38] sm:$0xff]
    %v312 = vld [vmem:[#allocation9 + $0x40] sm:$0xff]
    %v313 = vld [vmem:[#allocation9 + $0x48] sm:$0xff]
    %v314 = vld [vmem:[#allocation9 + $0x50] sm:$0xff]
    %v315 = vld [vmem:[#allocation9 + $0x58] sm:$0xff]
    %v316 = vld [vmem:[#allocation9 + $0x60] sm:$0xff]
    %v317 = vld [vmem:[#allocation9 + $0x68] sm:$0xff]
    %v318 = vld [vmem:[#allocation9 + $0x70] sm:$0xff]
    %v319 = vld [vmem:[#allocation9 + $0x78] sm:$0xff]
    %v320 = vld [vmem:[#allocation9 + $0x80] sm:$0xff]
    %v321 = vld [vmem:[#allocation9 + $0x88] sm:$0xff]
    %v322 = vld [vmem:[#allocation9 + $0x90] sm:$0xff]
    %v323 = vld [vmem:[#allocation9 + $0x98] sm:$0xff]
    %v324 = vld [vmem:[#allocation9 + $0xa0] sm:$0xff]
    %v325 = vld [vmem:[#allocation9 + $0xa8] sm:$0xff]
    %v326 = vld [vmem:[#allocation9 + $0xb0] sm:$0xff]
    %v327 = vld [vmem:[#allocation9 + $0xb8] sm:$0xff]
    %v328 = vld [vmem:[#allocation9 + $0xc0] sm:$0xff]
    %v329 = vld [vmem:[#allocation9 + $0xc8] sm:$0xff]
    %v330 = vld [vmem:[#allocation9 + $0xd0] sm:$0xff]
    %v331 = vld [vmem:[#allocation9 + $0xd8] sm:$0xff]
    %v332 = vld [vmem:[#allocation9 + $0xe0] sm:$0xff]
    %v333 = vld [vmem:[#allocation9 + $0xe8] sm:$0xff]
    %v334 = vld [vmem:[#allocation9 + $0xf0] sm:$0xff]
    %v335 = vld [vmem:[#allocation9 + $0xf8] sm:$0xff]
    %v336 = vld [vmem:[%s5] sm:$0x3]
    %v338 = vlaneseq
    %v339 = vshrl.u32 %v338, 7
    %v340 = vsub.s32 0, %v339
    %v341 = vrot.slane %v336, %v340
    %v342 = vlaneseq
    %v343 = vshrl.u32 %v342, 7
    %v344 = vsub.s32 1, %v343
    %v345 = vrot.slane %v336, %v344
    %v380 = vunpack.c.l.b16 %v304
    %v381 = vunpack.c.h.b16 %v304
    %v382 = vunpack.c.l.b16 %v305
    %v383 = vunpack.c.h.b16 %v305
    %v384 = vunpack.c.l.b16 %v306
    %v385 = vunpack.c.h.b16 %v306
    %v386 = vunpack.c.l.b16 %v307
    %v387 = vunpack.c.h.b16 %v307
    %v388 = vunpack.c.l.b16 %v308
    %v389 = vunpack.c.h.b16 %v308
    %v390 = vunpack.c.l.b16 %v309
    %v391 = vunpack.c.h.b16 %v309
    %v392 = vunpack.c.l.b16 %v310
    %v393 = vunpack.c.h.b16 %v310
    %v394 = vunpack.c.l.b16 %v311
    %v395 = vunpack.c.h.b16 %v311
    %v396 = vunpack.c.l.b16 %v312
    %v397 = vunpack.c.h.b16 %v312
    %v398 = vunpack.c.l.b16 %v313
    %v399 = vunpack.c.h.b16 %v313
    %v400 = vunpack.c.l.b16 %v314
    %v401 = vunpack.c.h.b16 %v314
    %v402 = vunpack.c.l.b16 %v315
    %v403 = vunpack.c.h.b16 %v315
    %v404 = vunpack.c.l.b16 %v316
    %v405 = vunpack.c.h.b16 %v316
    %v406 = vunpack.c.l.b16 %v317
    %v407 = vunpack.c.h.b16 %v317
    %v408 = vunpack.c.l.b16 %v318
    %v409 = vunpack.c.h.b16 %v318
    %v410 = vunpack.c.l.b16 %v319
    %v411 = vunpack.c.h.b16 %v319
    %v412 = vunpack.c.l.b16 %v320
    %v413 = vunpack.c.h.b16 %v320
    %v414 = vunpack.c.l.b16 %v321
    %v415 = vunpack.c.h.b16 %v321
    %v416 = vunpack.c.l.b16 %v322
    %v417 = vunpack.c.h.b16 %v322
    %v418 = vunpack.c.l.b16 %v323
    %v419 = vunpack.c.h.b16 %v323
    %v420 = vunpack.c.l.b16 %v324
    %v421 = vunpack.c.h.b16 %v324
    %v422 = vunpack.c.l.b16 %v325
    %v423 = vunpack.c.h.b16 %v325
    %v424 = vunpack.c.l.b16 %v326
    %v425 = vunpack.c.h.b16 %v326
    %v426 = vunpack.c.l.b16 %v327
    %v427 = vunpack.c.h.b16 %v327
    %v428 = vunpack.c.l.b16 %v328
    %v429 = vunpack.c.h.b16 %v328
    %v430 = vunpack.c.l.b16 %v329
    %v431 = vunpack.c.h.b16 %v329
    %v432 = vunpack.c.l.b16 %v330
    %v433 = vunpack.c.h.b16 %v330
    %v434 = vunpack.c.l.b16 %v331
    %v435 = vunpack.c.h.b16 %v331
    %v436 = vunpack.c.l.b16 %v332
    %v437 = vunpack.c.h.b16 %v332
    %v438 = vunpack.c.l.b16 %v333
    %v439 = vunpack.c.h.b16 %v333
    %v440 = vunpack.c.l.b16 %v334
    %v441 = vunpack.c.h.b16 %v334
    %v442 = vunpack.c.l.b16 %v335
    %v443 = vunpack.c.h.b16 %v335
    %v444 = vpack.c.b16 %v382, %v380
    %v445 = vpack.c.b16 %v383, %v381
    %v446 = vpack.c.b16 %v386, %v384
    %v447 = vpack.c.b16 %v387, %v385
    %v448 = vpack.c.b16 %v390, %v388
    %v449 = vpack.c.b16 %v391, %v389
    %v450 = vpack.c.b16 %v394, %v392
    %v451 = vpack.c.b16 %v395, %v393
    %v452 = vpack.c.b16 %v398, %v396
    %v453 = vpack.c.b16 %v399, %v397
    %v454 = vpack.c.b16 %v402, %v400
    %v455 = vpack.c.b16 %v403, %v401
    %v456 = vpack.c.b16 %v406, %v404
    %v457 = vpack.c.b16 %v407, %v405
    %v458 = vpack.c.b16 %v410, %v408
    %v459 = vpack.c.b16 %v411, %v409
    %v460 = vpack.c.b16 %v414, %v412
    %v461 = vpack.c.b16 %v415, %v413
    %v462 = vpack.c.b16 %v418, %v416
    %v463 = vpack.c.b16 %v419, %v417
    %v464 = vpack.c.b16 %v422, %v420
    %v465 = vpack.c.b16 %v423, %v421
    %v466 = vpack.c.b16 %v426, %v424
    %v467 = vpack.c.b16 %v427, %v425
    %v468 = vpack.c.b16 %v430, %v428
    %v469 = vpack.c.b16 %v431, %v429
    %v470 = vpack.c.b16 %v434, %v432
    %v471 = vpack.c.b16 %v435, %v433
    %v472 = vpack.c.b16 %v438, %v436
    %v473 = vpack.c.b16 %v439, %v437
    %v474 = vpack.c.b16 %v442, %v440
    %v475 = vpack.c.b16 %v443, %v441
    %508 = vmatprep.subr.bf16.mxu0 %v459
    %509 = vmatpush1.bf16.msra.mxu0 %v458
    %510 = vmatprep.subr.bf16.mxu0 %v457
    %511 = vmatpush1.bf16.msra.mxu0 %v456
    %512 = vmatprep.subr.bf16.mxu0 %v455
    %513 = vmatpush1.bf16.msra.mxu0 %v454
    %514 = vmatprep.subr.bf16.mxu0 %v453
    %515 = vmatpush1.bf16.msra.mxu0 %v452
    %516 = vmatprep.subr.bf16.mxu0 %v451
    %517 = vmatpush1.bf16.msra.mxu0 %v450
    %518 = vmatprep.subr.bf16.mxu0 %v449
    %519 = vmatpush1.bf16.msra.mxu0 %v448
    %520 = vmatprep.subr.bf16.mxu0 %v447
    %521 = vmatpush1.bf16.msra.mxu0 %v446
    %522 = vmatprep.subr.bf16.mxu0 %v445
    %523 = vmatpush1.bf16.msra.mxu0 %v444
    %524 = vmatprep.subr.bf16.mxu0 %v475
    %525 = vmatpush2.bf16.msra.mxu0 %v474
    %526 = vmatprep.subr.bf16.mxu0 %v473
    %527 = vmatpush2.bf16.msra.mxu0 %v472
    %528 = vmatprep.subr.bf16.mxu0 %v471
    %529 = vmatpush2.bf16.msra.mxu0 %v470
    %530 = vmatprep.subr.bf16.mxu0 %v469
    %531 = vmatpush2.bf16.msra.mxu0 %v468
    %532 = vmatprep.subr.bf16.mxu0 %v467
    %533 = vmatpush2.bf16.msra.mxu0 %v466
    %534 = vmatprep.subr.bf16.mxu0 %v465
    %535 = vmatpush2.bf16.msra.mxu0 %v464
    %536 = vmatprep.subr.bf16.mxu0 %v463
    %537 = vmatpush2.bf16.msra.mxu0 %v462
    %538 = vmatprep.subr.bf16.mxu0 %v461
    %539 = vmatpush2.bf16.msra.mxu0 %v460
    %540 = vmatprep.mubr.bf16.mxu0 %v303
    %541 = vmatmul.mubr.bf16.gmra.mxu0 %v302
    %v542 = vpop.f32.mrf.mxu0
    %v543 = vadd.f32 %v341, %v542
    %v544 = vpop.f32.mrf.mxu0
    %v545 = vadd.f32 %v345, %v544
    %v546 = vpop.f32.mrf.mxu0
    %v547 = vadd.f32 %v341, %v546
    %v548 = vpop.f32.mrf.mxu0
    %v549 = vadd.f32 %v345, %v548
    %550 = vdwg.mxu0
    %v551 = vmax.f32 %v543, 0.0
    %v552 = vmax.f32 %v545, 0.0
    %v553 = vmax.f32 %v547, 0.0
    %v554 = vmax.f32 %v549, 0.0
    %v555 = vpack.c.bf16 %v553, %v551
    %v556 = vpack.c.bf16 %v554, %v552
    %v557 = vld [vmem:[#allocation10] sm:$0xff]
    %v558 = vld [vmem:[#allocation10 + $0x8] sm:$0xff]
    %v559 = vld [vmem:[#allocation10 + $0x10] sm:$0xff]
    %v560 = vld [vmem:[#allocation10 + $0x18] sm:$0xff]
    %v561 = vld [vmem:[#allocation10 + $0x20] sm:$0xff]
    %v562 = vld [vmem:[#allocation10 + $0x28] sm:$0xff]
    %v563 = vld [vmem:[#allocation10 + $0x30] sm:$0xff]
    %v564 = vld [vmem:[#allocation10 + $0x38] sm:$0xff]
    %v565 = vld [vmem:[#allocation10 + $0x40] sm:$0xff]
    %v566 = vld [vmem:[#allocation10 + $0x48] sm:$0xff]
    %v567 = vld [vmem:[#allocation10 + $0x50] sm:$0xff]
    %v568 = vld [vmem:[#allocation10 + $0x58] sm:$0xff]
    %v569 = vld [vmem:[#allocation10 + $0x60] sm:$0xff]
    %v570 = vld [vmem:[#allocation10 + $0x68] sm:$0xff]
    %v571 = vld [vmem:[#allocation10 + $0x70] sm:$0xff]
    %v572 = vld [vmem:[#allocation10 + $0x78] sm:$0xff]
    %v573 = vld [vmem:[#allocation10 + $0x80] sm:$0xff]
    %v574 = vld [vmem:[#allocation10 + $0x88] sm:$0xff]
    %v575 = vld [vmem:[#allocation10 + $0x90] sm:$0xff]
    %v576 = vld [vmem:[#allocation10 + $0x98] sm:$0xff]
    %v577 = vld [vmem:[#allocation10 + $0xa0] sm:$0xff]
    %v578 = vld [vmem:[#allocation10 + $0xa8] sm:$0xff]
    %v579 = vld [vmem:[#allocation10 + $0xb0] sm:$0xff]
    %v580 = vld [vmem:[#allocation10 + $0xb8] sm:$0xff]
    %v581 = vld [vmem:[#allocation10 + $0xc0] sm:$0xff]
    %v582 = vld [vmem:[#allocation10 + $0xc8] sm:$0xff]
    %v583 = vld [vmem:[#allocation10 + $0xd0] sm:$0xff]
    %v584 = vld [vmem:[#allocation10 + $0xd8] sm:$0xff]
    %v585 = vld [vmem:[#allocation10 + $0xe0] sm:$0xff]
    %v586 = vld [vmem:[#allocation10 + $0xe8] sm:$0xff]
    %v587 = vld [vmem:[#allocation10 + $0xf0] sm:$0xff]
    %v588 = vld [vmem:[#allocation10 + $0xf8] sm:$0xff]
    %v589 = vld [vmem:[%s7] sm:$0x3]
    %v591 = vlaneseq
    %v592 = vshrl.u32 %v591, 7
    %v593 = vsub.s32 0, %v592
    %v594 = vrot.slane %v589, %v593
    %v595 = vlaneseq
    %v596 = vshrl.u32 %v595, 7
    %v597 = vsub.s32 1, %v596
    %v598 = vrot.slane %v589, %v597
    %v633 = vunpack.c.l.b16 %v557
    %v634 = vunpack.c.h.b16 %v557
    %v635 = vunpack.c.l.b16 %v558
    %v636 = vunpack.c.h.b16 %v558
    %v637 = vunpack.c.l.b16 %v559
    %v638 = vunpack.c.h.b16 %v559
    %v639 = vunpack.c.l.b16 %v560
    %v640 = vunpack.c.h.b16 %v560
    %v641 = vunpack.c.l.b16 %v561
    %v642 = vunpack.c.h.b16 %v561
    %v643 = vunpack.c.l.b16 %v562
    %v644 = vunpack.c.h.b16 %v562
    %v645 = vunpack.c.l.b16 %v563
    %v646 = vunpack.c.h.b16 %v563
    %v647 = vunpack.c.l.b16 %v564
    %v648 = vunpack.c.h.b16 %v564
    %v649 = vunpack.c.l.b16 %v565
    %v650 = vunpack.c.h.b16 %v565
    %v651 = vunpack.c.l.b16 %v566
    %v652 = vunpack.c.h.b16 %v566
    %v653 = vunpack.c.l.b16 %v567
    %v654 = vunpack.c.h.b16 %v567
    %v655 = vunpack.c.l.b16 %v568
    %v656 = vunpack.c.h.b16 %v568
    %v657 = vunpack.c.l.b16 %v569
    %v658 = vunpack.c.h.b16 %v569
    %v659 = vunpack.c.l.b16 %v570
    %v660 = vunpack.c.h.b16 %v570
    %v661 = vunpack.c.l.b16 %v571
    %v662 = vunpack.c.h.b16 %v571
    %v663 = vunpack.c.l.b16 %v572
    %v664 = vunpack.c.h.b16 %v572
    %v665 = vunpack.c.l.b16 %v573
    %v666 = vunpack.c.h.b16 %v573
    %v667 = vunpack.c.l.b16 %v574
    %v668 = vunpack.c.h.b16 %v574
    %v669 = vunpack.c.l.b16 %v575
    %v670 = vunpack.c.h.b16 %v575
    %v671 = vunpack.c.l.b16 %v576
    %v672 = vunpack.c.h.b16 %v576
    %v673 = vunpack.c.l.b16 %v577
    %v674 = vunpack.c.h.b16 %v577
    %v675 = vunpack.c.l.b16 %v578
    %v676 = vunpack.c.h.b16 %v578
    %v677 = vunpack.c.l.b16 %v579
    %v678 = vunpack.c.h.b16 %v579
    %v679 = vunpack.c.l.b16 %v580
    %v680 = vunpack.c.h.b16 %v580
    %v681 = vunpack.c.l.b16 %v581
    %v682 = vunpack.c.h.b16 %v581
    %v683 = vunpack.c.l.b16 %v582
    %v684 = vunpack.c.h.b16 %v582
    %v685 = vunpack.c.l.b16 %v583
    %v686 = vunpack.c.h.b16 %v583
    %v687 = vunpack.c.l.b16 %v584
    %v688 = vunpack.c.h.b16 %v584
    %v689 = vunpack.c.l.b16 %v585
    %v690 = vunpack.c.h.b16 %v585
    %v691 = vunpack.c.l.b16 %v586
    %v692 = vunpack.c.h.b16 %v586
    %v693 = vunpack.c.l.b16 %v587
    %v694 = vunpack.c.h.b16 %v587
    %v695 = vunpack.c.l.b16 %v588
    %v696 = vunpack.c.h.b16 %v588
    %v697 = vpack.c.b16 %v635, %v633
    %v698 = vpack.c.b16 %v636, %v634
    %v699 = vpack.c.b16 %v639, %v637
    %v700 = vpack.c.b16 %v640, %v638
    %v701 = vpack.c.b16 %v643, %v641
    %v702 = vpack.c.b16 %v644, %v642
    %v703 = vpack.c.b16 %v647, %v645
    %v704 = vpack.c.b16 %v648, %v646
    %v705 = vpack.c.b16 %v651, %v649
    %v706 = vpack.c.b16 %v652, %v650
    %v707 = vpack.c.b16 %v655, %v653
    %v708 = vpack.c.b16 %v656, %v654
    %v709 = vpack.c.b16 %v659, %v657
    %v710 = vpack.c.b16 %v660, %v658
    %v711 = vpack.c.b16 %v663, %v661
    %v712 = vpack.c.b16 %v664, %v662
    %v713 = vpack.c.b16 %v667, %v665
    %v714 = vpack.c.b16 %v668, %v666
    %v715 = vpack.c.b16 %v671, %v669
    %v716 = vpack.c.b16 %v672, %v670
    %v717 = vpack.c.b16 %v675, %v673
    %v718 = vpack.c.b16 %v676, %v674
    %v719 = vpack.c.b16 %v679, %v677
    %v720 = vpack.c.b16 %v680, %v678
    %v721 = vpack.c.b16 %v683, %v681
    %v722 = vpack.c.b16 %v684, %v682
    %v723 = vpack.c.b16 %v687, %v685
    %v724 = vpack.c.b16 %v688, %v686
    %v725 = vpack.c.b16 %v691, %v689
    %v726 = vpack.c.b16 %v692, %v690
    %v727 = vpack.c.b16 %v695, %v693
    %v728 = vpack.c.b16 %v696, %v694
    %761 = vmatprep.subr.bf16.mxu0 %v712
    %762 = vmatpush1.bf16.msra.mxu0 %v711
    %763 = vmatprep.subr.bf16.mxu0 %v710
    %764 = vmatpush1.bf16.msra.mxu0 %v709
    %765 = vmatprep.subr.bf16.mxu0 %v708
    %766 = vmatpush1.bf16.msra.mxu0 %v707
    %767 = vmatprep.subr.bf16.mxu0 %v706
    %768 = vmatpush1.bf16.msra.mxu0 %v705
    %769 = vmatprep.subr.bf16.mxu0 %v704
    %770 = vmatpush1.bf16.msra.mxu0 %v703
    %771 = vmatprep.subr.bf16.mxu0 %v702
    %772 = vmatpush1.bf16.msra.mxu0 %v701
    %773 = vmatprep.subr.bf16.mxu0 %v700
    %774 = vmatpush1.bf16.msra.mxu0 %v699
    %775 = vmatprep.subr.bf16.mxu0 %v698
    %776 = vmatpush1.bf16.msra.mxu0 %v697
    %777 = vmatprep.subr.bf16.mxu0 %v728
    %778 = vmatpush2.bf16.msra.mxu0 %v727
    %779 = vmatprep.subr.bf16.mxu0 %v726
    %780 = vmatpush2.bf16.msra.mxu0 %v725
    %781 = vmatprep.subr.bf16.mxu0 %v724
    %782 = vmatpush2.bf16.msra.mxu0 %v723
    %783 = vmatprep.subr.bf16.mxu0 %v722
    %784 = vmatpush2.bf16.msra.mxu0 %v721
    %785 = vmatprep.subr.bf16.mxu0 %v720
    %786 = vmatpush2.bf16.msra.mxu0 %v719
    %787 = vmatprep.subr.bf16.mxu0 %v718
    %788 = vmatpush2.bf16.msra.mxu0 %v717
    %789 = vmatprep.subr.bf16.mxu0 %v716
    %790 = vmatpush2.bf16.msra.mxu0 %v715
    %791 = vmatprep.subr.bf16.mxu0 %v714
    %792 = vmatpush2.bf16.msra.mxu0 %v713
    %793 = vmatprep.mubr.bf16.mxu0 %v556
    %794 = vmatmul.mubr.bf16.gmra.mxu0 %v555
    %v795 = vpop.f32.mrf.mxu0
    %v796 = vadd.f32 %v594, %v795
    %v797 = vpop.f32.mrf.mxu0
    %v798 = vadd.f32 %v598, %v797
    %v799 = vpop.f32.mrf.mxu0
    %v800 = vadd.f32 %v594, %v799
    %v801 = vpop.f32.mrf.mxu0
    %v802 = vadd.f32 %v598, %v801
    %803 = vdwg.mxu0
    %v804 = vmax.f32 %v796, 0.0
    %v805 = vmax.f32 %v798, 0.0
    %v806 = vmax.f32 %v800, 0.0
    %v807 = vmax.f32 %v802, 0.0
    %v808 = vpack.c.bf16 %v806, %v804
    %v809 = vpack.c.bf16 %v807, %v805
    %v810 = vld [vmem:[#allocation12] sm:$0xff]
    %v811 = vld [vmem:[#allocation12 + $0x8] sm:$0xff]
    %v812 = vld [vmem:[#allocation12 + $0x10] sm:$0xff]
    %v813 = vld [vmem:[#allocation12 + $0x18] sm:$0xff]
    %v814 = vld [vmem:[#allocation12 + $0x20] sm:$0xff]
    %v815 = vld [vmem:[#allocation12 + $0x28] sm:$0xff]
    %v816 = vld [vmem:[#allocation12 + $0x30] sm:$0xff]
    %v817 = vld [vmem:[#allocation12 + $0x38] sm:$0xff]
    %v818 = vld [vmem:[#allocation12 + $0x40] sm:$0xff]
    %v819 = vld [vmem:[#allocation12 + $0x48] sm:$0xff]
    %v820 = vld [vmem:[#allocation12 + $0x50] sm:$0xff]
    %v821 = vld [vmem:[#allocation12 + $0x58] sm:$0xff]
    %v822 = vld [vmem:[#allocation12 + $0x60] sm:$0xff]
    %v823 = vld [vmem:[#allocation12 + $0x68] sm:$0xff]
    %v824 = vld [vmem:[#allocation12 + $0x70] sm:$0xff]
    %v825 = vld [vmem:[#allocation12 + $0x78] sm:$0xff]
    %v826 = vld [vmem:[#allocation12 + $0x80] sm:$0xff]
    %v827 = vld [vmem:[#allocation12 + $0x88] sm:$0xff]
    %v828 = vld [vmem:[#allocation12 + $0x90] sm:$0xff]
    %v829 = vld [vmem:[#allocation12 + $0x98] sm:$0xff]
    %v830 = vld [vmem:[#allocation12 + $0xa0] sm:$0xff]
    %v831 = vld [vmem:[#allocation12 + $0xa8] sm:$0xff]
    %v832 = vld [vmem:[#allocation12 + $0xb0] sm:$0xff]
    %v833 = vld [vmem:[#allocation12 + $0xb8] sm:$0xff]
    %v834 = vld [vmem:[#allocation12 + $0xc0] sm:$0xff]
    %v835 = vld [vmem:[#allocation12 + $0xc8] sm:$0xff]
    %v836 = vld [vmem:[#allocation12 + $0xd0] sm:$0xff]
    %v837 = vld [vmem:[#allocation12 + $0xd8] sm:$0xff]
    %v838 = vld [vmem:[#allocation12 + $0xe0] sm:$0xff]
    %v839 = vld [vmem:[#allocation12 + $0xe8] sm:$0xff]
    %v840 = vld [vmem:[#allocation12 + $0xf0] sm:$0xff]
    %v841 = vld [vmem:[#allocation12 + $0xf8] sm:$0xff]
    %v842 = vld [vmem:[%s9] sm:$0x3]
    %v844 = vlaneseq
    %v845 = vshrl.u32 %v844, 7
    %v846 = vsub.s32 0, %v845
    %v847 = vrot.slane %v842, %v846
    %v848 = vlaneseq
    %v849 = vshrl.u32 %v848, 7
    %v850 = vsub.s32 1, %v849
    %v851 = vrot.slane %v842, %v850
    %v886 = vunpack.c.l.b16 %v810
    %v887 = vunpack.c.h.b16 %v810
    %v888 = vunpack.c.l.b16 %v811
    %v889 = vunpack.c.h.b16 %v811
    %v890 = vunpack.c.l.b16 %v812
    %v891 = vunpack.c.h.b16 %v812
    %v892 = vunpack.c.l.b16 %v813
    %v893 = vunpack.c.h.b16 %v813
    %v894 = vunpack.c.l.b16 %v814
    %v895 = vunpack.c.h.b16 %v814
    %v896 = vunpack.c.l.b16 %v815
    %v897 = vunpack.c.h.b16 %v815
    %v898 = vunpack.c.l.b16 %v816
    %v899 = vunpack.c.h.b16 %v816
    %v900 = vunpack.c.l.b16 %v817
    %v901 = vunpack.c.h.b16 %v817
    %v902 = vunpack.c.l.b16 %v818
    %v903 = vunpack.c.h.b16 %v818
    %v904 = vunpack.c.l.b16 %v819
    %v905 = vunpack.c.h.b16 %v819
    %v906 = vunpack.c.l.b16 %v820
    %v907 = vunpack.c.h.b16 %v820
    %v908 = vunpack.c.l.b16 %v821
    %v909 = vunpack.c.h.b16 %v821
    %v910 = vunpack.c.l.b16 %v822
    %v911 = vunpack.c.h.b16 %v822
    %v912 = vunpack.c.l.b16 %v823
    %v913 = vunpack.c.h.b16 %v823
    %v914 = vunpack.c.l.b16 %v824
    %v915 = vunpack.c.h.b16 %v824
    %v916 = vunpack.c.l.b16 %v825
    %v917 = vunpack.c.h.b16 %v825
    %v918 = vunpack.c.l.b16 %v826
    %v919 = vunpack.c.h.b16 %v826
    %v920 = vunpack.c.l.b16 %v827
    %v921 = vunpack.c.h.b16 %v827
    %v922 = vunpack.c.l.b16 %v828
    %v923 = vunpack.c.h.b16 %v828
    %v924 = vunpack.c.l.b16 %v829
    %v925 = vunpack.c.h.b16 %v829
    %v926 = vunpack.c.l.b16 %v830
    %v927 = vunpack.c.h.b16 %v830
    %v928 = vunpack.c.l.b16 %v831
    %v929 = vunpack.c.h.b16 %v831
    %v930 = vunpack.c.l.b16 %v832
    %v931 = vunpack.c.h.b16 %v832
    %v932 = vunpack.c.l.b16 %v833
    %v933 = vunpack.c.h.b16 %v833
    %v934 = vunpack.c.l.b16 %v834
    %v935 = vunpack.c.h.b16 %v834
    %v936 = vunpack.c.l.b16 %v835
    %v937 = vunpack.c.h.b16 %v835
    %v938 = vunpack.c.l.b16 %v836
    %v939 = vunpack.c.h.b16 %v836
    %v940 = vunpack.c.l.b16 %v837
    %v941 = vunpack.c.h.b16 %v837
    %v942 = vunpack.c.l.b16 %v838
    %v943 = vunpack.c.h.b16 %v838
    %v944 = vunpack.c.l.b16 %v839
    %v945 = vunpack.c.h.b16 %v839
    %v946 = vunpack.c.l.b16 %v840
    %v947 = vunpack.c.h.b16 %v840
    %v948 = vunpack.c.l.b16 %v841
    %v949 = vunpack.c.h.b16 %v841
    %v950 = vpack.c.b16 %v888, %v886
    %v951 = vpack.c.b16 %v889, %v887
    %v952 = vpack.c.b16 %v892, %v890
    %v953 = vpack.c.b16 %v893, %v891
    %v954 = vpack.c.b16 %v896, %v894
    %v955 = vpack.c.b16 %v897, %v895
    %v956 = vpack.c.b16 %v900, %v898
    %v957 = vpack.c.b16 %v901, %v899
    %v958 = vpack.c.b16 %v904, %v902
    %v959 = vpack.c.b16 %v905, %v903
    %v960 = vpack.c.b16 %v908, %v906
    %v961 = vpack.c.b16 %v909, %v907
    %v962 = vpack.c.b16 %v912, %v910
    %v963 = vpack.c.b16 %v913, %v911
    %v964 = vpack.c.b16 %v916, %v914
    %v965 = vpack.c.b16 %v917, %v915
    %v966 = vpack.c.b16 %v920, %v918
    %v967 = vpack.c.b16 %v921, %v919
    %v968 = vpack.c.b16 %v924, %v922
    %v969 = vpack.c.b16 %v925, %v923
    %v970 = vpack.c.b16 %v928, %v926
    %v971 = vpack.c.b16 %v929, %v927
    %v972 = vpack.c.b16 %v932, %v930
    %v973 = vpack.c.b16 %v933, %v931
    %v974 = vpack.c.b16 %v936, %v934
    %v975 = vpack.c.b16 %v937, %v935
    %v976 = vpack.c.b16 %v940, %v938
    %v977 = vpack.c.b16 %v941, %v939
    %v978 = vpack.c.b16 %v944, %v942
    %v979 = vpack.c.b16 %v945, %v943
    %v980 = vpack.c.b16 %v948, %v946
    %v981 = vpack.c.b16 %v949, %v947
    %1014 = vmatprep.subr.bf16.mxu0 %v965
    %1015 = vmatpush1.bf16.msra.mxu0 %v964
    %1016 = vmatprep.subr.bf16.mxu0 %v963
    %1017 = vmatpush1.bf16.msra.mxu0 %v962
    %1018 = vmatprep.subr.bf16.mxu0 %v961
    %1019 = vmatpush1.bf16.msra.mxu0 %v960
    %1020 = vmatprep.subr.bf16.mxu0 %v959
    %1021 = vmatpush1.bf16.msra.mxu0 %v958
    %1022 = vmatprep.subr.bf16.mxu0 %v957
    %1023 = vmatpush1.bf16.msra.mxu0 %v956
    %1024 = vmatprep.subr.bf16.mxu0 %v955
    %1025 = vmatpush1.bf16.msra.mxu0 %v954
    %1026 = vmatprep.subr.bf16.mxu0 %v953
    %1027 = vmatpush1.bf16.msra.mxu0 %v952
    %1028 = vmatprep.subr.bf16.mxu0 %v951
    %1029 = vmatpush1.bf16.msra.mxu0 %v950
    %1030 = vmatprep.subr.bf16.mxu0 %v981
    %1031 = vmatpush2.bf16.msra.mxu0 %v980
    %1032 = vmatprep.subr.bf16.mxu0 %v979
    %1033 = vmatpush2.bf16.msra.mxu0 %v978
    %1034 = vmatprep.subr.bf16.mxu0 %v977
    %1035 = vmatpush2.bf16.msra.mxu0 %v976
    %1036 = vmatprep.subr.bf16.mxu0 %v975
    %1037 = vmatpush2.bf16.msra.mxu0 %v974
    %1038 = vmatprep.subr.bf16.mxu0 %v973
    %1039 = vmatpush2.bf16.msra.mxu0 %v972
    %1040 = vmatprep.subr.bf16.mxu0 %v971
    %1041 = vmatpush2.bf16.msra.mxu0 %v970
    %1042 = vmatprep.subr.bf16.mxu0 %v969
    %1043 = vmatpush2.bf16.msra.mxu0 %v968
    %1044 = vmatprep.subr.bf16.mxu0 %v967
    %1045 = vmatpush2.bf16.msra.mxu0 %v966
    %1046 = vmatprep.mubr.bf16.mxu0 %v809
    %1047 = vmatmul.mubr.bf16.gmra.mxu0 %v808
    %v1048 = vpop.f32.mrf.mxu0
    %v1049 = vadd.f32 %v847, %v1048
    %v1050 = vpop.f32.mrf.mxu0
    %v1051 = vadd.f32 %v851, %v1050
    %v1052 = vpop.f32.mrf.mxu0
    %v1053 = vadd.f32 %v847, %v1052
    %v1054 = vpop.f32.mrf.mxu0
    %v1055 = vadd.f32 %v851, %v1054
    %1056 = vdwg.mxu0
    %v1057 = vmax.f32 %v1049, 0.0
    %v1058 = vmax.f32 %v1051, 0.0
    %v1059 = vmax.f32 %v1053, 0.0
    %v1060 = vmax.f32 %v1055, 0.0
    %v1061 = vpack.c.bf16 %v1059, %v1057
    %v1062 = vpack.c.bf16 %v1060, %v1058
    %v1063 = vld [vmem:[#allocation13] sm:$0xf]
    %v1064 = vld [vmem:[#allocation13 + $0x4] sm:$0xf]
    %v1065 = vld [vmem:[#allocation13 + $0x8] sm:$0xf]
    %v1066 = vld [vmem:[#allocation13 + $0xc] sm:$0xf]
    %v1067 = vld [vmem:[#allocation13 + $0x10] sm:$0xf]
    %v1068 = vld [vmem:[#allocation13 + $0x14] sm:$0xf]
    %v1069 = vld [vmem:[#allocation13 + $0x18] sm:$0xf]
    %v1070 = vld [vmem:[#allocation13 + $0x1c] sm:$0xf]
    %v1071 = vld [vmem:[#allocation13 + $0x20] sm:$0xf]
    %v1072 = vld [vmem:[#allocation13 + $0x24] sm:$0xf]
    %v1073 = vld [vmem:[#allocation13 + $0x28] sm:$0xf]
    %v1074 = vld [vmem:[#allocation13 + $0x2c] sm:$0xf]
    %v1075 = vld [vmem:[#allocation13 + $0x30] sm:$0xf]
    %v1076 = vld [vmem:[#allocation13 + $0x34] sm:$0xf]
    %v1077 = vld [vmem:[#allocation13 + $0x38] sm:$0xf]
    %v1078 = vld [vmem:[#allocation13 + $0x3c] sm:$0xf]
    %v1079 = vld [vmem:[#allocation13 + $0x40] sm:$0xf]
    %v1080 = vld [vmem:[#allocation13 + $0x44] sm:$0xf]
    %v1081 = vld [vmem:[#allocation13 + $0x48] sm:$0xf]
    %v1082 = vld [vmem:[#allocation13 + $0x4c] sm:$0xf]
    %v1083 = vld [vmem:[#allocation13 + $0x50] sm:$0xf]
    %v1084 = vld [vmem:[#allocation13 + $0x54] sm:$0xf]
    %v1085 = vld [vmem:[#allocation13 + $0x58] sm:$0xf]
    %v1086 = vld [vmem:[#allocation13 + $0x5c] sm:$0xf]
    %v1087 = vld [vmem:[#allocation13 + $0x60] sm:$0xf]
    %v1088 = vld [vmem:[#allocation13 + $0x64] sm:$0xf]
    %v1089 = vld [vmem:[#allocation13 + $0x68] sm:$0xf]
    %v1090 = vld [vmem:[#allocation13 + $0x6c] sm:$0xf]
    %v1091 = vld [vmem:[#allocation13 + $0x70] sm:$0xf]
    %v1092 = vld [vmem:[#allocation13 + $0x74] sm:$0xf]
    %v1093 = vld [vmem:[#allocation13 + $0x78] sm:$0xf]
    %v1094 = vld [vmem:[#allocation13 + $0x7c] sm:$0xf]
    %v1095 = vld [vmem:[%s11] sm:$0x1]
    %v1097 = vlaneseq
    %v1098 = vshrl.u32 %v1097, 7
    %v1099 = vsub.s32 0, %v1098
    %v1100 = vrot.slane %v1095, %v1099
    %v1134 = vunpack.c.l.b16 %v1063
    %v1135 = vunpack.c.l.b16 %v1064
    %v1136 = vunpack.c.l.b16 %v1065
    %v1137 = vunpack.c.l.b16 %v1066
    %v1138 = vunpack.c.l.b16 %v1067
    %v1139 = vunpack.c.l.b16 %v1068
    %v1140 = vunpack.c.l.b16 %v1069
    %v1141 = vunpack.c.l.b16 %v1070
    %v1142 = vunpack.c.l.b16 %v1071
    %v1143 = vunpack.c.l.b16 %v1072
    %v1144 = vunpack.c.l.b16 %v1073
    %v1145 = vunpack.c.l.b16 %v1074
    %v1146 = vunpack.c.l.b16 %v1075
    %v1147 = vunpack.c.l.b16 %v1076
    %v1148 = vunpack.c.l.b16 %v1077
    %v1149 = vunpack.c.l.b16 %v1078
    %v1150 = vunpack.c.l.b16 %v1079
    %v1151 = vunpack.c.l.b16 %v1080
    %v1152 = vunpack.c.l.b16 %v1081
    %v1153 = vunpack.c.l.b16 %v1082
    %v1154 = vunpack.c.l.b16 %v1083
    %v1155 = vunpack.c.l.b16 %v1084
    %v1156 = vunpack.c.l.b16 %v1085
    %v1157 = vunpack.c.l.b16 %v1086
    %v1158 = vunpack.c.l.b16 %v1087
    %v1159 = vunpack.c.l.b16 %v1088
    %v1160 = vunpack.c.l.b16 %v1089
    %v1161 = vunpack.c.l.b16 %v1090
    %v1162 = vunpack.c.l.b16 %v1091
    %v1163 = vunpack.c.l.b16 %v1092
    %v1164 = vunpack.c.l.b16 %v1093
    %v1165 = vunpack.c.l.b16 %v1094
    %v1166 = vpack.c.b16 %v1135, %v1134
    %v1167 = vpack.c.b16 %v1137, %v1136
    %v1168 = vpack.c.b16 %v1139, %v1138
    %v1169 = vpack.c.b16 %v1141, %v1140
    %v1170 = vpack.c.b16 %v1143, %v1142
    %v1171 = vpack.c.b16 %v1145, %v1144
    %v1172 = vpack.c.b16 %v1147, %v1146
    %v1173 = vpack.c.b16 %v1149, %v1148
    %v1174 = vpack.c.b16 %v1151, %v1150
    %v1175 = vpack.c.b16 %v1153, %v1152
    %v1176 = vpack.c.b16 %v1155, %v1154
    %v1177 = vpack.c.b16 %v1157, %v1156
    %v1178 = vpack.c.b16 %v1159, %v1158
    %v1179 = vpack.c.b16 %v1161, %v1160
    %v1180 = vpack.c.b16 %v1163, %v1162
    %v1181 = vpack.c.b16 %v1165, %v1164
    %1198 = vmatprep.subr.bf16.mxu0 0
    %1199 = vmatpush1.bf16.msra.mxu0 %v1173
    %1200 = vmatprep.subr.bf16.mxu0 0
    %1201 = vmatpush1.bf16.msra.mxu0 %v1172
    %1202 = vmatprep.subr.bf16.mxu0 0
    %1203 = vmatpush1.bf16.msra.mxu0 %v1171
    %1204 = vmatprep.subr.bf16.mxu0 0
    %1205 = vmatpush1.bf16.msra.mxu0 %v1170
    %1206 = vmatprep.subr.bf16.mxu0 0
    %1207 = vmatpush1.bf16.msra.mxu0 %v1169
    %1208 = vmatprep.subr.bf16.mxu0 0
    %1209 = vmatpush1.bf16.msra.mxu0 %v1168
    %1210 = vmatprep.subr.bf16.mxu0 0
    %1211 = vmatpush1.bf16.msra.mxu0 %v1167
    %1212 = vmatprep.subr.bf16.mxu0 0
    %1213 = vmatpush1.bf16.msra.mxu0 %v1166
    %1214 = vmatprep.subr.bf16.mxu0 0
    %1215 = vmatpush2.bf16.msra.mxu0 %v1181
    %1216 = vmatprep.subr.bf16.mxu0 0
    %1217 = vmatpush2.bf16.msra.mxu0 %v1180
    %1218 = vmatprep.subr.bf16.mxu0 0
    %1219 = vmatpush2.bf16.msra.mxu0 %v1179
    %1220 = vmatprep.subr.bf16.mxu0 0
    %1221 = vmatpush2.bf16.msra.mxu0 %v1178
    %1222 = vmatprep.subr.bf16.mxu0 0
    %1223 = vmatpush2.bf16.msra.mxu0 %v1177
    %1224 = vmatprep.subr.bf16.mxu0 0
    %1225 = vmatpush2.bf16.msra.mxu0 %v1176
    %1226 = vmatprep.subr.bf16.mxu0 0
    %1227 = vmatpush2.bf16.msra.mxu0 %v1175
    %1228 = vmatprep.subr.bf16.mxu0 0
    %1229 = vmatpush2.bf16.msra.mxu0 %v1174
    %1230 = vmatprep.mubr.bf16.mxu0 %v1062
    %1231 = vmatmul.mubr.bf16.gmra.mxu0 %v1061
    %v1232 = vpop.f32.mrf.mxu0
    %v1233 = vadd.f32 %v1100, %v1232
    %v1234 = vpop.f32.mrf.mxu0
    %v1235 = vpop.f32.mrf.mxu0
    %v1236 = vadd.f32 %v1100, %v1235
    %v1237 = vpop.f32.mrf.mxu0
    %1238 = vdwg.mxu0
    %1239 = vst [vmem:[#allocation15] sm:$0xff] %v1233
    %1240 = vst [vmem:[#allocation15 + $0x8] sm:$0xff] %v1236
    // Predicated region
    $region70: #{tpu_custom_call.1} parent=1 // pred_check
      _
    $region71: #{tpu_custom_call.1} parent=1 // pred_check_branch
      %1242 = sbr.rel (0) target = $region73
    $region72: #{tpu_custom_call.1} parent=1 // pred_region
      %s1244 = ssub.s32 256, 256
      %1245 = vsyncadd [#allocation6], %s1244
      %s1246 = sshll.u32 [#allocation15], 4
      %s1247 = int_to_ptr.vmem [resolvable:$true] %s1246
      %1252 = dma.vmem_to_hbm [thread:$0]  %s1247, 256, %s12, [#allocation6], 128, 128, 8
    $region73: #{tpu_custom_call.1} parent=1 // pred_fallthru
      _
    // Predicated region
    $region74: #{tpu_custom_call.1} parent=1 // pred_check
      _
    $region75: #{tpu_custom_call.1} parent=1 // pred_check_branch
      %1254 = sbr.rel (0) target = $region77
    $region76: #{tpu_custom_call.1} parent=1 // pred_region
      %1255 = dma.done [#allocation6], 256
    $region77: #{tpu_custom_call.1} parent=1 // pred_fallthru
      _
    %1256 = vsyncpa [#allocation5], 1
    %1257 = vsyncpa [#allocation8], 1
    %1258 = vsyncpa [#allocation11], 1
    %1259 = vsyncpa [#allocation14], 1
    %1260 = vsyncpa [#allocation6], 1

// kernel: tpu_custom_call.1
$region0: #{tpu_custom_call.1}
  #allocation0 [shape = 'u32[]', space=smem, size = 0x4, offset = 0x4, fixed_abs, tag = 'smem constant byte address 0x4 - core index']
  #allocation1 [shape = 'u32[144,128]{1,0:T(1,128)}', space=vmem, size = 0x12000, scoped, tag = 'internal scratch']
  #allocation2 [shape = 's32[1]{0}', space=sflag, size = 0x4, scoped, tag = 'scoped memory for tpu_custom_call.1']
  #allocation3 [shape = 'u8[512]{0}', space=smem, size = 0x200, scoped, tag = 'prefetched SMEM operand 0']
  %s0 = inlined_call_operand.hbm [shape: f32[3], index: 0, kind: input, shape index: {}]
  %s1 = inlined_call_operand.hbm [shape: f32[16,128], index: 1, kind: input, shape index: {}]
  %s2 = inlined_call_operand.hbm [shape: bf16[128,256], index: 2, kind: input, shape index: {}]
  %s3 = inlined_call_operand.vmem [shape: f32[1,256], index: 3, kind: input, shape index: {}]
  %s4 = inlined_call_operand.hbm [shape: bf16[256,256], index: 4, kind: input, shape index: {}]
  %s5 = inlined_call_operand.vmem [shape: f32[1,256], index: 5, kind: input, shape index: {}]
  %s6 = inlined_call_operand.hbm [shape: bf16[256,256], index: 6, kind: input, shape index: {}]
  %s7 = inlined_call_operand.vmem [shape: f32[1,256], index: 7, kind: input, shape index: {}]
  %s8 = inlined_call_operand.hbm [shape: bf16[256,256], index: 8, kind: input, shape index: {}]
  %s9 = inlined_call_operand.vmem [shape: f32[1,256], index: 9, kind: input, shape index: {}]
  %s10 = inlined_call_operand.hbm [shape: bf16[256,128], index: 10, kind: input, shape index: {}]
  %s11 = inlined_call_operand.vmem [shape: f32[1,128], index: 11, kind: input, shape index: {}]
  %s12 = inlined_call_operand.hbm [shape: f32[16,128], index: 12, kind: output, shape index: {}]
  %s13 = sld [smem:[#allocation0]]
  $region78: #{tpu_custom_call.1} parent=0
    _
  %s15 = ssub.s32 1, %s13
  %s16 = scalar_select 0, %s15, %s13
  %18 = dma.hbm_to_smem %s0, 16, [#allocation3], [#allocation2]
  %19 = dma.done [#allocation2], 16
  %20 = sfence
  $region1: #{tpu_custom_call.1} parent=0
    #allocation4 [shape = 'u8[8192]{0}', space=vmem, size = 0x2000, scoped, tag = 'input window, operand 1, single buffered']
    #allocation5 [shape = 's32[1]{0}', space=sflag, size = 0x4, scoped, tag = 'scoped memory for tpu_custom_call.1']
    #allocation6 [shape = 's32[1]{0}', space=sflag, size = 0x4, scoped, tag = 'scoped memory for tpu_custom_call.1']
    #allocation7 [shape = 'u8[65536]{0}', space=vmem, size = 0x10000, scoped, tag = 'input window, operand 2, single buffered']
    #allocation8 [shape = 's32[1]{0}', space=sflag, size = 0x4, scoped, tag = 'scoped memory for tpu_custom_call.1']
    #allocation9 [shape = 'u8[131072]{0}', space=vmem, size = 0x20000, scoped, tag = 'input window, operand 4, single buffered']
    #allocation10 [shape = 'u8[131072]{0}', space=vmem, size = 0x20000, scoped, tag = 'input window, operand 6, single buffered']
    #allocation11 [shape = 's32[1]{0}', space=sflag, size = 0x4, scoped, tag = 'scoped memory for tpu_custom_call.1']
    #allocation12 [shape = 'u8[131072]{0}', space=vmem, size = 0x20000, scoped, tag = 'input window, operand 8, single buffered']
    #allocation13 [shape = 'u8[65536]{0}', space=vmem, size = 0x10000, scoped, tag = 'input window, operand 10, single buffered']
    #allocation14 [shape = 's32[1]{0}', space=sflag, size = 0x4, scoped, tag = 'scoped memory for tpu_custom_call.1']
    #allocation15 [shape = 'u8[8192]{0}', space=vmem, size = 0x2000, scoped, tag = 'output window, operand 0, single buffered']
    %21 = vsyncpa [#allocation5], 0
    %22 = vsyncpa [#allocation8], 0
    %23 = vsyncpa [#allocation11], 0
    %24 = vsyncpa [#allocation14], 0
    %25 = vsyncpa [#allocation6], 0
    // Predicated region
    $region2: #{tpu_custom_call.1} parent=1 // pred_check
      _
    $region3: #{tpu_custom_call.1} parent=1 // pred_check_branch
      %27 = sbr.rel (0) target = $region5
    $region4: #{tpu_custom_call.1} parent=1 // pred_region
      %s29 = ssub.s32 256, 256
      %30 = vsyncadd [#allocation5], %s29
      %s31 = sshll.u32 [#allocation4], 4
      %s32 = int_to_ptr.vmem [resolvable:$true] %s31
      %37 = dma.hbm_to_vmem [thread:$0]  %s1, 256, %s32, [#allocation5], 128, 128, 8
    $region5: #{tpu_custom_call.1} parent=1 // pred_fallthru
      _
    // Predicated region
    $region6: #{tpu_custom_call.1} parent=1 // pred_check
      _
    $region7: #{tpu_custom_call.1} parent=1 // pred_check_branch
      %39 = sbr.rel (0) target = $region9
    $region8: #{tpu_custom_call.1} parent=1 // pred_region
      %s41 = ssub.s32 2048, 2048
      %42 = vsyncadd [#allocation8], %s41
      %s43 = sshll.u32 [#allocation7], 4
      %s44 = int_to_ptr.vmem [resolvable:$true] %s43
      %49 = dma.hbm_to_vmem [thread:$0]  %s2, 2048, %s44, [#allocation8], 128, 128, 8
    $region9: #{tpu_custom_call.1} parent=1 // pred_fallthru
      _
    // Predicated region
    $region10: #{tpu_custom_call.1} parent=1 // pred_check
      _
    $region11: #{tpu_custom_call.1} parent=1 // pred_check_branch
      %51 = sbr.rel (0) target = $region13
    $region12: #{tpu_custom_call.1} parent=1 // pred_region
      _
    $region13: #{tpu_custom_call.1} parent=1 // pred_fallthru
      _
    // Predicated region
    $region14: #{tpu_custom_call.1} parent=1 // pred_check
      _
    $region15: #{tpu_custom_call.1} parent=1 // pred_check_branch
      %53 = sbr.rel (0) target = $region17
    $region16: #{tpu_custom_call.1} parent=1 // pred_region
      %s55 = ssub.s32 4096, 4096
      %56 = vsyncadd [#allocation8], %s55
      %s57 = sshll.u32 [#allocation9], 4
      %s58 = int_to_ptr.vmem [resolvable:$true] %s57
      %63 = dma.hbm_to_vmem [thread:$0]  %s4, 4096, %s58, [#allocation8], 128, 128, 8
    $region17: #{tpu_custom_call.1} parent=1 // pred_fallthru
      _
    // Predicated region
    $region18: #{tpu_custom_call.1} parent=1 // pred_check
      _
    $region19: #{tpu_custom_call.1} parent=1 // pred_check_branch
      %65 = sbr.rel (0) target = $region21
    $region20: #{tpu_custom_call.1} parent=1 // pred_region
      _
    $region21: #{tpu_custom_call.1} parent=1 // pred_fallthru
      _
    // Predicated region
    $region22: #{tpu_custom_call.1} parent=1 // pred_check
      _
    $region23: #{tpu_custom_call.1} parent=1 // pred_check_branch
      %67 = sbr.rel (0) target = $region25
    $region24: #{tpu_custom_call.1} parent=1 // pred_region
      %s69 = ssub.s32 4096, 4096
      %70 = vsyncadd [#allocation11], %s69
      %s71 = sshll.u32 [#allocation10], 4
      %s72 = int_to_ptr.vmem [resolvable:$true] %s71
      %77 = dma.hbm_to_vmem [thread:$0]  %s6, 4096, %s72, [#allocation11], 128, 128, 8
    $region25: #{tpu_custom_call.1} parent=1 // pred_fallthru
      _
    // Predicated region
    $region26: #{tpu_custom_call.1} parent=1 // pred_check
      _
    $region27: #{tpu_custom_call.1} parent=1 // pred_check_branch
      %79 = sbr.rel (0) target = $region29
    $region28: #{tpu_custom_call.1} parent=1 // pred_region
      _
    $region29: #{tpu_custom_call.1} parent=1 // pred_fallthru
      _
    // Predicated region
    $region30: #{tpu_custom_call.1} parent=1 // pred_check
      _
    $region31: #{tpu_custom_call.1} parent=1 // pred_check_branch
      %81 = sbr.rel (0) target = $region33
    $region32: #{tpu_custom_call.1} parent=1 // pred_region
      %s83 = ssub.s32 4096, 4096
      %84 = vsyncadd [#allocation11], %s83
      %s85 = sshll.u32 [#allocation12], 4
      %s86 = int_to_ptr.vmem [resolvable:$true] %s85
      %91 = dma.hbm_to_vmem [thread:$0]  %s8, 4096, %s86, [#allocation11], 128, 128, 8
    $region33: #{tpu_custom_call.1} parent=1 // pred_fallthru
      _
    // Predicated region
    $region34: #{tpu_custom_call.1} parent=1 // pred_check
      _
    $region35: #{tpu_custom_call.1} parent=1 // pred_check_branch
      %93 = sbr.rel (0) target = $region37
    $region36: #{tpu_custom_call.1} parent=1 // pred_region
      _
    $region37: #{tpu_custom_call.1} parent=1 // pred_fallthru
      _
    // Predicated region
    $region38: #{tpu_custom_call.1} parent=1 // pred_check
      _
    $region39: #{tpu_custom_call.1} parent=1 // pred_check_branch
      %95 = sbr.rel (0) target = $region41
    $region40: #{tpu_custom_call.1} parent=1 // pred_region
      %s97 = ssub.s32 2048, 2048
      %98 = vsyncadd [#allocation14], %s97
      %s99 = sshll.u32 [#allocation13], 4
      %s100 = int_to_ptr.vmem [resolvable:$true] %s99
      %105 = dma.hbm_to_vmem [thread:$0]  %s10, 2048, %s100, [#allocation14], 64, 64, 4
    $region41: #{tpu_custom_call.1} parent=1 // pred_fallthru
      _
    // Predicated region
    $region42: #{tpu_custom_call.1} parent=1 // pred_check
      _
    $region43: #{tpu_custom_call.1} parent=1 // pred_check_branch
      %107 = sbr.rel (0) target = $region45
    $region44: #{tpu_custom_call.1} parent=1 // pred_region
      _
    $region45: #{tpu_custom_call.1} parent=1 // pred_fallthru
      _
    // Predicated region
    $region46: #{tpu_custom_call.1} parent=1 // pred_check
      _
    $region47: #{tpu_custom_call.1} parent=1 // pred_check_branch
      %109 = sbr.rel (0) target = $region49
    $region48: #{tpu_custom_call.1} parent=1 // pred_region
      %110 = dma.done [#allocation5], 256
    $region49: #{tpu_custom_call.1} parent=1 // pred_fallthru
      _
    // Predicated region
    $region50: #{tpu_custom_call.1} parent=1 // pred_check
      _
    $region51: #{tpu_custom_call.1} parent=1 // pred_check_branch
      %112 = sbr.rel (0) target = $region53
    $region52: #{tpu_custom_call.1} parent=1 // pred_region
      %113 = dma.done [#allocation8], 2048
    $region53: #{tpu_custom_call.1} parent=1 // pred_fallthru
      _
    // Predicated region
    $region54: #{tpu_custom_call.1} parent=1 // pred_check
      _
    $region55: #{tpu_custom_call.1} parent=1 // pred_check_branch
      %115 = sbr.rel (0) target = $region57
    $region56: #{tpu_custom_call.1} parent=1 // pred_region
      %116 = dma.done [#allocation8], 4096
    $region57: #{tpu_custom_call.1} parent=1 // pred_fallthru
      _
    // Predicated region
    $region58: #{tpu_custom_call.1} parent=1 // pred_check
      _
    $region59: #{tpu_custom_call.1} parent=1 // pred_check_branch
      %118 = sbr.rel (0) target = $region61
    $region60: #{tpu_custom_call.1} parent=1 // pred_region
      %119 = dma.done [#allocation11], 4096
    $region61: #{tpu_custom_call.1} parent=1 // pred_fallthru
      _
    // Predicated region
    $region62: #{tpu_custom_call.1} parent=1 // pred_check
      _
    $region63: #{tpu_custom_call.1} parent=1 // pred_check_branch
      %121 = sbr.rel (0) target = $region65
    $region64: #{tpu_custom_call.1} parent=1 // pred_region
      %122 = dma.done [#allocation11], 4096
    $region65: #{tpu_custom_call.1} parent=1 // pred_fallthru
      _
    // Predicated region
    $region66: #{tpu_custom_call.1} parent=1 // pred_check
      _
    $region67: #{tpu_custom_call.1} parent=1 // pred_check_branch
      %124 = sbr.rel (0) target = $region69
    $region68: #{tpu_custom_call.1} parent=1 // pred_region
      %125 = dma.done [#allocation14], 2048
    $region69: #{tpu_custom_call.1} parent=1 // pred_fallthru
      _
    %s127 = sld [smem:[#allocation3]]
    %s128 = smax.f32 %s127, 0.0
    %s129 = sld [smem:[#allocation3 + $0x1]]
    %s130 = smax.f32 %s129, 0.0
    %s131 = sld [smem:[#allocation3 + $0x2]]
    %s132 = smax.f32 %s131, 0.0
    %v133 = vlaneseq
    %v134 = vand.u32 %v133, 127
    %vm135 = vcmp.lt.s32.totalorder %v134, 32
    %vm136 = vcmp.lt.s32.totalorder %v134, 96
    %v137 = vstv %s130
    %v138 = vstv %s132
    %v139 = vsel %vm136, %v137, %v138
    %v140 = vstv %s128
    %v141 = vsel %vm135, %v140, %v139
    %v142 = vld [vmem:[#allocation4] sm:$0xff]
    %v143 = vld [vmem:[#allocation4 + $0x8] sm:$0xff]
    %v144 = vmul.f32 %v142, %v141
    %v145 = vmul.f32 %v143, %v141
    %v146 = vpack.c.bf16 %v145, %v144
    %v147 = vld [vmem:[#allocation7] sm:$0xff]
    %v148 = vld [vmem:[#allocation7 + $0x8] sm:$0xff]
    %v149 = vld [vmem:[#allocation7 + $0x10] sm:$0xff]
    %v150 = vld [vmem:[#allocation7 + $0x18] sm:$0xff]
    %v151 = vld [vmem:[#allocation7 + $0x20] sm:$0xff]
    %v152 = vld [vmem:[#allocation7 + $0x28] sm:$0xff]
    %v153 = vld [vmem:[#allocation7 + $0x30] sm:$0xff]
    %v154 = vld [vmem:[#allocation7 + $0x38] sm:$0xff]
    %v155 = vld [vmem:[#allocation7 + $0x40] sm:$0xff]
    %v156 = vld [vmem:[#allocation7 + $0x48] sm:$0xff]
    %v157 = vld [vmem:[#allocation7 + $0x50] sm:$0xff]
    %v158 = vld [vmem:[#allocation7 + $0x58] sm:$0xff]
    %v159 = vld [vmem:[#allocation7 + $0x60] sm:$0xff]
    %v160 = vld [vmem:[#allocation7 + $0x68] sm:$0xff]
    %v161 = vld [vmem:[#allocation7 + $0x70] sm:$0xff]
    %v162 = vld [vmem:[#allocation7 + $0x78] sm:$0xff]
    %v163 = vld [vmem:[%s3] sm:$0x3]
    %v165 = vlaneseq
    %v166 = vshrl.u32 %v165, 7
    %v167 = vsub.s32 0, %v166
    %v168 = vrot.slane %v163, %v167
    %v169 = vlaneseq
    %v170 = vshrl.u32 %v169, 7
    %v171 = vsub.s32 1, %v170
    %v172 = vrot.slane %v163, %v171
    %v191 = vunpack.c.l.b16 %v147
    %v192 = vunpack.c.h.b16 %v147
    %v193 = vunpack.c.l.b16 %v148
    %v194 = vunpack.c.h.b16 %v148
    %v195 = vunpack.c.l.b16 %v149
    %v196 = vunpack.c.h.b16 %v149
    %v197 = vunpack.c.l.b16 %v150
    %v198 = vunpack.c.h.b16 %v150
    %v199 = vunpack.c.l.b16 %v151
    %v200 = vunpack.c.h.b16 %v151
    %v201 = vunpack.c.l.b16 %v152
    %v202 = vunpack.c.h.b16 %v152
    %v203 = vunpack.c.l.b16 %v153
    %v204 = vunpack.c.h.b16 %v153
    %v205 = vunpack.c.l.b16 %v154
    %v206 = vunpack.c.h.b16 %v154
    %v207 = vunpack.c.l.b16 %v155
    %v208 = vunpack.c.h.b16 %v155
    %v209 = vunpack.c.l.b16 %v156
    %v210 = vunpack.c.h.b16 %v156
    %v211 = vunpack.c.l.b16 %v157
    %v212 = vunpack.c.h.b16 %v157
    %v213 = vunpack.c.l.b16 %v158
    %v214 = vunpack.c.h.b16 %v158
    %v215 = vunpack.c.l.b16 %v159
    %v216 = vunpack.c.h.b16 %v159
    %v217 = vunpack.c.l.b16 %v160
    %v218 = vunpack.c.h.b16 %v160
    %v219 = vunpack.c.l.b16 %v161
    %v220 = vunpack.c.h.b16 %v161
    %v221 = vunpack.c.l.b16 %v162
    %v222 = vunpack.c.h.b16 %v162
    %v223 = vpack.c.b16 %v193, %v191
    %v224 = vpack.c.b16 %v194, %v192
    %v225 = vpack.c.b16 %v197, %v195
    %v226 = vpack.c.b16 %v198, %v196
    %v227 = vpack.c.b16 %v201, %v199
    %v228 = vpack.c.b16 %v202, %v200
    %v229 = vpack.c.b16 %v205, %v203
    %v230 = vpack.c.b16 %v206, %v204
    %v231 = vpack.c.b16 %v209, %v207
    %v232 = vpack.c.b16 %v210, %v208
    %v233 = vpack.c.b16 %v213, %v211
    %v234 = vpack.c.b16 %v214, %v212
    %v235 = vpack.c.b16 %v217, %v215
    %v236 = vpack.c.b16 %v218, %v216
    %v237 = vpack.c.b16 %v221, %v219
    %v238 = vpack.c.b16 %v222, %v220
    %255 = vmatprep.subr.bf16.mxu0 %v238
    %256 = vmatpush1.bf16.msra.mxu0 %v237
    %257 = vmatprep.subr.bf16.mxu0 %v236
    %258 = vmatpush1.bf16.msra.mxu0 %v235
    %259 = vmatprep.subr.bf16.mxu0 %v234
    %260 = vmatpush1.bf16.msra.mxu0 %v233
    %261 = vmatprep.subr.bf16.mxu0 %v232
    %262 = vmatpush1.bf16.msra.mxu0 %v231
    %263 = vmatprep.subr.bf16.mxu0 %v230
    %264 = vmatpush1.bf16.msra.mxu0 %v229
    %265 = vmatprep.subr.bf16.mxu0 %v228
    %266 = vmatpush1.bf16.msra.mxu0 %v227
    %267 = vmatprep.subr.bf16.mxu0 %v226
    %268 = vmatpush1.bf16.msra.mxu0 %v225
    %269 = vmatprep.subr.bf16.mxu0 %v224
    %270 = vmatpush1.bf16.msra.mxu0 %v223
    %271 = vmatprep.subr.bf16.mxu0 0
    %272 = vmatpush2.bf16.msra.mxu0 0
    %273 = vmatprep.subr.bf16.mxu0 0
    %274 = vmatpush2.bf16.msra.mxu0 0
    %275 = vmatprep.subr.bf16.mxu0 0
    %276 = vmatpush2.bf16.msra.mxu0 0
    %277 = vmatprep.subr.bf16.mxu0 0
    %278 = vmatpush2.bf16.msra.mxu0 0
    %279 = vmatprep.subr.bf16.mxu0 0
    %280 = vmatpush2.bf16.msra.mxu0 0
    %281 = vmatprep.subr.bf16.mxu0 0
    %282 = vmatpush2.bf16.msra.mxu0 0
    %283 = vmatprep.subr.bf16.mxu0 0
    %284 = vmatpush2.bf16.msra.mxu0 0
    %285 = vmatprep.subr.bf16.mxu0 0
    %286 = vmatpush2.bf16.msra.mxu0 0
    %287 = vmatprep.mubr.bf16.mxu0 0
    %288 = vmatmul.mubr.bf16.gmra.mxu0 %v146
    %v289 = vpop.f32.mrf.mxu0
    %v290 = vadd.f32 %v168, %v289
    %v291 = vpop.f32.mrf.mxu0
    %v292 = vadd.f32 %v172, %v291
    %v293 = vpop.f32.mrf.mxu0
    %v294 = vadd.f32 %v168, %v293
    %v295 = vpop.f32.mrf.mxu0
    %v296 = vadd.f32 %v172, %v295
    %297 = vdwg.mxu0
    %v298 = vtanh.pop %v290
    %v299 = vtanh.pop %v292
    %v300 = vtanh.pop %v294
    %v301 = vtanh.pop %v296
    %v302 = vpack.c.bf16 %v300, %v298
    %v303 = vpack.c.bf16 %v301, %v299
    %v304 = vld [vmem:[#allocation9] sm:$0xff]
    %v305 = vld [vmem:[#allocation9 + $0x8] sm:$0xff]
    %v306 = vld [vmem:[#allocation9 + $0x10] sm:$0xff]
    %v307 = vld [vmem:[#allocation9 + $0x18] sm:$0xff]
    %v308 = vld [vmem:[#allocation9 + $0x20] sm:$0xff]
    %v309 = vld [vmem:[#allocation9 + $0x28] sm:$0xff]
    %v310 = vld [vmem:[#allocation9 + $0x30] sm:$0xff]
    %v311 = vld [vmem:[#allocation9 + $0x38] sm:$0xff]
    %v312 = vld [vmem:[#allocation9 + $0x40] sm:$0xff]
    %v313 = vld [vmem:[#allocation9 + $0x48] sm:$0xff]
    %v314 = vld [vmem:[#allocation9 + $0x50] sm:$0xff]
    %v315 = vld [vmem:[#allocation9 + $0x58] sm:$0xff]
    %v316 = vld [vmem:[#allocation9 + $0x60] sm:$0xff]
    %v317 = vld [vmem:[#allocation9 + $0x68] sm:$0xff]
    %v318 = vld [vmem:[#allocation9 + $0x70] sm:$0xff]
    %v319 = vld [vmem:[#allocation9 + $0x78] sm:$0xff]
    %v320 = vld [vmem:[#allocation9 + $0x80] sm:$0xff]
    %v321 = vld [vmem:[#allocation9 + $0x88] sm:$0xff]
    %v322 = vld [vmem:[#allocation9 + $0x90] sm:$0xff]
    %v323 = vld [vmem:[#allocation9 + $0x98] sm:$0xff]
    %v324 = vld [vmem:[#allocation9 + $0xa0] sm:$0xff]
    %v325 = vld [vmem:[#allocation9 + $0xa8] sm:$0xff]
    %v326 = vld [vmem:[#allocation9 + $0xb0] sm:$0xff]
    %v327 = vld [vmem:[#allocation9 + $0xb8] sm:$0xff]
    %v328 = vld [vmem:[#allocation9 + $0xc0] sm:$0xff]
    %v329 = vld [vmem:[#allocation9 + $0xc8] sm:$0xff]
    %v330 = vld [vmem:[#allocation9 + $0xd0] sm:$0xff]
    %v331 = vld [vmem:[#allocation9 + $0xd8] sm:$0xff]
    %v332 = vld [vmem:[#allocation9 + $0xe0] sm:$0xff]
    %v333 = vld [vmem:[#allocation9 + $0xe8] sm:$0xff]
    %v334 = vld [vmem:[#allocation9 + $0xf0] sm:$0xff]
    %v335 = vld [vmem:[#allocation9 + $0xf8] sm:$0xff]
    %v336 = vld [vmem:[%s5] sm:$0x3]
    %v338 = vlaneseq
    %v339 = vshrl.u32 %v338, 7
    %v340 = vsub.s32 0, %v339
    %v341 = vrot.slane %v336, %v340
    %v342 = vlaneseq
    %v343 = vshrl.u32 %v342, 7
    %v344 = vsub.s32 1, %v343
    %v345 = vrot.slane %v336, %v344
    %v380 = vunpack.c.l.b16 %v304
    %v381 = vunpack.c.h.b16 %v304
    %v382 = vunpack.c.l.b16 %v305
    %v383 = vunpack.c.h.b16 %v305
    %v384 = vunpack.c.l.b16 %v306
    %v385 = vunpack.c.h.b16 %v306
    %v386 = vunpack.c.l.b16 %v307
    %v387 = vunpack.c.h.b16 %v307
    %v388 = vunpack.c.l.b16 %v308
    %v389 = vunpack.c.h.b16 %v308
    %v390 = vunpack.c.l.b16 %v309
    %v391 = vunpack.c.h.b16 %v309
    %v392 = vunpack.c.l.b16 %v310
    %v393 = vunpack.c.h.b16 %v310
    %v394 = vunpack.c.l.b16 %v311
    %v395 = vunpack.c.h.b16 %v311
    %v396 = vunpack.c.l.b16 %v312
    %v397 = vunpack.c.h.b16 %v312
    %v398 = vunpack.c.l.b16 %v313
    %v399 = vunpack.c.h.b16 %v313
    %v400 = vunpack.c.l.b16 %v314
    %v401 = vunpack.c.h.b16 %v314
    %v402 = vunpack.c.l.b16 %v315
    %v403 = vunpack.c.h.b16 %v315
    %v404 = vunpack.c.l.b16 %v316
    %v405 = vunpack.c.h.b16 %v316
    %v406 = vunpack.c.l.b16 %v317
    %v407 = vunpack.c.h.b16 %v317
    %v408 = vunpack.c.l.b16 %v318
    %v409 = vunpack.c.h.b16 %v318
    %v410 = vunpack.c.l.b16 %v319
    %v411 = vunpack.c.h.b16 %v319
    %v412 = vunpack.c.l.b16 %v320
    %v413 = vunpack.c.h.b16 %v320
    %v414 = vunpack.c.l.b16 %v321
    %v415 = vunpack.c.h.b16 %v321
    %v416 = vunpack.c.l.b16 %v322
    %v417 = vunpack.c.h.b16 %v322
    %v418 = vunpack.c.l.b16 %v323
    %v419 = vunpack.c.h.b16 %v323
    %v420 = vunpack.c.l.b16 %v324
    %v421 = vunpack.c.h.b16 %v324
    %v422 = vunpack.c.l.b16 %v325
    %v423 = vunpack.c.h.b16 %v325
    %v424 = vunpack.c.l.b16 %v326
    %v425 = vunpack.c.h.b16 %v326
    %v426 = vunpack.c.l.b16 %v327
    %v427 = vunpack.c.h.b16 %v327
    %v428 = vunpack.c.l.b16 %v328
    %v429 = vunpack.c.h.b16 %v328
    %v430 = vunpack.c.l.b16 %v329
    %v431 = vunpack.c.h.b16 %v329
    %v432 = vunpack.c.l.b16 %v330
    %v433 = vunpack.c.h.b16 %v330
    %v434 = vunpack.c.l.b16 %v331
    %v435 = vunpack.c.h.b16 %v331
    %v436 = vunpack.c.l.b16 %v332
    %v437 = vunpack.c.h.b16 %v332
    %v438 = vunpack.c.l.b16 %v333
    %v439 = vunpack.c.h.b16 %v333
    %v440 = vunpack.c.l.b16 %v334
    %v441 = vunpack.c.h.b16 %v334
    %v442 = vunpack.c.l.b16 %v335
    %v443 = vunpack.c.h.b16 %v335
    %v444 = vpack.c.b16 %v382, %v380
    %v445 = vpack.c.b16 %v383, %v381
    %v446 = vpack.c.b16 %v386, %v384
    %v447 = vpack.c.b16 %v387, %v385
    %v448 = vpack.c.b16 %v390, %v388
    %v449 = vpack.c.b16 %v391, %v389
    %v450 = vpack.c.b16 %v394, %v392
    %v451 = vpack.c.b16 %v395, %v393
    %v452 = vpack.c.b16 %v398, %v396
    %v453 = vpack.c.b16 %v399, %v397
    %v454 = vpack.c.b16 %v402, %v400
    %v455 = vpack.c.b16 %v403, %v401
    %v456 = vpack.c.b16 %v406, %v404
    %v457 = vpack.c.b16 %v407, %v405
    %v458 = vpack.c.b16 %v410, %v408
    %v459 = vpack.c.b16 %v411, %v409
    %v460 = vpack.c.b16 %v414, %v412
    %v461 = vpack.c.b16 %v415, %v413
    %v462 = vpack.c.b16 %v418, %v416
    %v463 = vpack.c.b16 %v419, %v417
    %v464 = vpack.c.b16 %v422, %v420
    %v465 = vpack.c.b16 %v423, %v421
    %v466 = vpack.c.b16 %v426, %v424
    %v467 = vpack.c.b16 %v427, %v425
    %v468 = vpack.c.b16 %v430, %v428
    %v469 = vpack.c.b16 %v431, %v429
    %v470 = vpack.c.b16 %v434, %v432
    %v471 = vpack.c.b16 %v435, %v433
    %v472 = vpack.c.b16 %v438, %v436
    %v473 = vpack.c.b16 %v439, %v437
    %v474 = vpack.c.b16 %v442, %v440
    %v475 = vpack.c.b16 %v443, %v441
    %508 = vmatprep.subr.bf16.mxu0 %v459
    %509 = vmatpush1.bf16.msra.mxu0 %v458
    %510 = vmatprep.subr.bf16.mxu0 %v457
    %511 = vmatpush1.bf16.msra.mxu0 %v456
    %512 = vmatprep.subr.bf16.mxu0 %v455
    %513 = vmatpush1.bf16.msra.mxu0 %v454
    %514 = vmatprep.subr.bf16.mxu0 %v453
    %515 = vmatpush1.bf16.msra.mxu0 %v452
    %516 = vmatprep.subr.bf16.mxu0 %v451
    %517 = vmatpush1.bf16.msra.mxu0 %v450
    %518 = vmatprep.subr.bf16.mxu0 %v449
    %519 = vmatpush1.bf16.msra.mxu0 %v448
    %520 = vmatprep.subr.bf16.mxu0 %v447
    %521 = vmatpush1.bf16.msra.mxu0 %v446
    %522 = vmatprep.subr.bf16.mxu0 %v445
    %523 = vmatpush1.bf16.msra.mxu0 %v444
    %524 = vmatprep.subr.bf16.mxu0 %v475
    %525 = vmatpush2.bf16.msra.mxu0 %v474
    %526 = vmatprep.subr.bf16.mxu0 %v473
    %527 = vmatpush2.bf16.msra.mxu0 %v472
    %528 = vmatprep.subr.bf16.mxu0 %v471
    %529 = vmatpush2.bf16.msra.mxu0 %v470
    %530 = vmatprep.subr.bf16.mxu0 %v469
    %531 = vmatpush2.bf16.msra.mxu0 %v468
    %532 = vmatprep.subr.bf16.mxu0 %v467
    %533 = vmatpush2.bf16.msra.mxu0 %v466
    %534 = vmatprep.subr.bf16.mxu0 %v465
    %535 = vmatpush2.bf16.msra.mxu0 %v464
    %536 = vmatprep.subr.bf16.mxu0 %v463
    %537 = vmatpush2.bf16.msra.mxu0 %v462
    %538 = vmatprep.subr.bf16.mxu0 %v461
    %539 = vmatpush2.bf16.msra.mxu0 %v460
    %540 = vmatprep.mubr.bf16.mxu0 %v303
    %541 = vmatmul.mubr.bf16.gmra.mxu0 %v302
    %v542 = vpop.f32.mrf.mxu0
    %v543 = vadd.f32 %v341, %v542
    %v544 = vpop.f32.mrf.mxu0
    %v545 = vadd.f32 %v345, %v544
    %v546 = vpop.f32.mrf.mxu0
    %v547 = vadd.f32 %v341, %v546
    %v548 = vpop.f32.mrf.mxu0
    %v549 = vadd.f32 %v345, %v548
    %550 = vdwg.mxu0
    %v551 = vmax.f32 %v543, 0.0
    %v552 = vmax.f32 %v545, 0.0
    %v553 = vmax.f32 %v547, 0.0
    %v554 = vmax.f32 %v549, 0.0
    %v555 = vpack.c.bf16 %v553, %v551
    %v556 = vpack.c.bf16 %v554, %v552
    %v557 = vld [vmem:[#allocation10] sm:$0xff]
    %v558 = vld [vmem:[#allocation10 + $0x8] sm:$0xff]
    %v559 = vld [vmem:[#allocation10 + $0x10] sm:$0xff]
    %v560 = vld [vmem:[#allocation10 + $0x18] sm:$0xff]
    %v561 = vld [vmem:[#allocation10 + $0x20] sm:$0xff]
    %v562 = vld [vmem:[#allocation10 + $0x28] sm:$0xff]
    %v563 = vld [vmem:[#allocation10 + $0x30] sm:$0xff]
    %v564 = vld [vmem:[#allocation10 + $0x38] sm:$0xff]
    %v565 = vld [vmem:[#allocation10 + $0x40] sm:$0xff]
    %v566 = vld [vmem:[#allocation10 + $0x48] sm:$0xff]
    %v567 = vld [vmem:[#allocation10 + $0x50] sm:$0xff]
    %v568 = vld [vmem:[#allocation10 + $0x58] sm:$0xff]
    %v569 = vld [vmem:[#allocation10 + $0x60] sm:$0xff]
    %v570 = vld [vmem:[#allocation10 + $0x68] sm:$0xff]
    %v571 = vld [vmem:[#allocation10 + $0x70] sm:$0xff]
    %v572 = vld [vmem:[#allocation10 + $0x78] sm:$0xff]
    %v573 = vld [vmem:[#allocation10 + $0x80] sm:$0xff]
    %v574 = vld [vmem:[#allocation10 + $0x88] sm:$0xff]
    %v575 = vld [vmem:[#allocation10 + $0x90] sm:$0xff]
    %v576 = vld [vmem:[#allocation10 + $0x98] sm:$0xff]
    %v577 = vld [vmem:[#allocation10 + $0xa0] sm:$0xff]
    %v578 = vld [vmem:[#allocation10 + $0xa8] sm:$0xff]
    %v579 = vld [vmem:[#allocation10 + $0xb0] sm:$0xff]
    %v580 = vld [vmem:[#allocation10 + $0xb8] sm:$0xff]
    %v581 = vld [vmem:[#allocation10 + $0xc0] sm:$0xff]
    %v582 = vld [vmem:[#allocation10 + $0xc8] sm:$0xff]
    %v583 = vld [vmem:[#allocation10 + $0xd0] sm:$0xff]
    %v584 = vld [vmem:[#allocation10 + $0xd8] sm:$0xff]
    %v585 = vld [vmem:[#allocation10 + $0xe0] sm:$0xff]
    %v586 = vld [vmem:[#allocation10 + $0xe8] sm:$0xff]
    %v587 = vld [vmem:[#allocation10 + $0xf0] sm:$0xff]
    %v588 = vld [vmem:[#allocation10 + $0xf8] sm:$0xff]
    %v589 = vld [vmem:[%s7] sm:$0x3]
    %v591 = vlaneseq
    %v592 = vshrl.u32 %v591, 7
    %v593 = vsub.s32 0, %v592
    %v594 = vrot.slane %v589, %v593
    %v595 = vlaneseq
    %v596 = vshrl.u32 %v595, 7
    %v597 = vsub.s32 1, %v596
    %v598 = vrot.slane %v589, %v597
    %v633 = vunpack.c.l.b16 %v557
    %v634 = vunpack.c.h.b16 %v557
    %v635 = vunpack.c.l.b16 %v558
    %v636 = vunpack.c.h.b16 %v558
    %v637 = vunpack.c.l.b16 %v559
    %v638 = vunpack.c.h.b16 %v559
    %v639 = vunpack.c.l.b16 %v560
    %v640 = vunpack.c.h.b16 %v560
    %v641 = vunpack.c.l.b16 %v561
    %v642 = vunpack.c.h.b16 %v561
    %v643 = vunpack.c.l.b16 %v562
    %v644 = vunpack.c.h.b16 %v562
    %v645 = vunpack.c.l.b16 %v563
    %v646 = vunpack.c.h.b16 %v563
    %v647 = vunpack.c.l.b16 %v564
    %v648 = vunpack.c.h.b16 %v564
    %v649 = vunpack.c.l.b16 %v565
    %v650 = vunpack.c.h.b16 %v565
    %v651 = vunpack.c.l.b16 %v566
    %v652 = vunpack.c.h.b16 %v566
    %v653 = vunpack.c.l.b16 %v567
    %v654 = vunpack.c.h.b16 %v567
    %v655 = vunpack.c.l.b16 %v568
    %v656 = vunpack.c.h.b16 %v568
    %v657 = vunpack.c.l.b16 %v569
    %v658 = vunpack.c.h.b16 %v569
    %v659 = vunpack.c.l.b16 %v570
    %v660 = vunpack.c.h.b16 %v570
    %v661 = vunpack.c.l.b16 %v571
    %v662 = vunpack.c.h.b16 %v571
    %v663 = vunpack.c.l.b16 %v572
    %v664 = vunpack.c.h.b16 %v572
    %v665 = vunpack.c.l.b16 %v573
    %v666 = vunpack.c.h.b16 %v573
    %v667 = vunpack.c.l.b16 %v574
    %v668 = vunpack.c.h.b16 %v574
    %v669 = vunpack.c.l.b16 %v575
    %v670 = vunpack.c.h.b16 %v575
    %v671 = vunpack.c.l.b16 %v576
    %v672 = vunpack.c.h.b16 %v576
    %v673 = vunpack.c.l.b16 %v577
    %v674 = vunpack.c.h.b16 %v577
    %v675 = vunpack.c.l.b16 %v578
    %v676 = vunpack.c.h.b16 %v578
    %v677 = vunpack.c.l.b16 %v579
    %v678 = vunpack.c.h.b16 %v579
    %v679 = vunpack.c.l.b16 %v580
    %v680 = vunpack.c.h.b16 %v580
    %v681 = vunpack.c.l.b16 %v581
    %v682 = vunpack.c.h.b16 %v581
    %v683 = vunpack.c.l.b16 %v582
    %v684 = vunpack.c.h.b16 %v582
    %v685 = vunpack.c.l.b16 %v583
    %v686 = vunpack.c.h.b16 %v583
    %v687 = vunpack.c.l.b16 %v584
    %v688 = vunpack.c.h.b16 %v584
    %v689 = vunpack.c.l.b16 %v585
    %v690 = vunpack.c.h.b16 %v585
    %v691 = vunpack.c.l.b16 %v586
    %v692 = vunpack.c.h.b16 %v586
    %v693 = vunpack.c.l.b16 %v587
    %v694 = vunpack.c.h.b16 %v587
    %v695 = vunpack.c.l.b16 %v588
    %v696 = vunpack.c.h.b16 %v588
    %v697 = vpack.c.b16 %v635, %v633
    %v698 = vpack.c.b16 %v636, %v634
    %v699 = vpack.c.b16 %v639, %v637
    %v700 = vpack.c.b16 %v640, %v638
    %v701 = vpack.c.b16 %v643, %v641
    %v702 = vpack.c.b16 %v644, %v642
    %v703 = vpack.c.b16 %v647, %v645
    %v704 = vpack.c.b16 %v648, %v646
    %v705 = vpack.c.b16 %v651, %v649
    %v706 = vpack.c.b16 %v652, %v650
    %v707 = vpack.c.b16 %v655, %v653
    %v708 = vpack.c.b16 %v656, %v654
    %v709 = vpack.c.b16 %v659, %v657
    %v710 = vpack.c.b16 %v660, %v658
    %v711 = vpack.c.b16 %v663, %v661
    %v712 = vpack.c.b16 %v664, %v662
    %v713 = vpack.c.b16 %v667, %v665
    %v714 = vpack.c.b16 %v668, %v666
    %v715 = vpack.c.b16 %v671, %v669
    %v716 = vpack.c.b16 %v672, %v670
    %v717 = vpack.c.b16 %v675, %v673
    %v718 = vpack.c.b16 %v676, %v674
    %v719 = vpack.c.b16 %v679, %v677
    %v720 = vpack.c.b16 %v680, %v678
    %v721 = vpack.c.b16 %v683, %v681
    %v722 = vpack.c.b16 %v684, %v682
    %v723 = vpack.c.b16 %v687, %v685
    %v724 = vpack.c.b16 %v688, %v686
    %v725 = vpack.c.b16 %v691, %v689
    %v726 = vpack.c.b16 %v692, %v690
    %v727 = vpack.c.b16 %v695, %v693
    %v728 = vpack.c.b16 %v696, %v694
    %761 = vmatprep.subr.bf16.mxu0 %v712
    %762 = vmatpush1.bf16.msra.mxu0 %v711
    %763 = vmatprep.subr.bf16.mxu0 %v710
    %764 = vmatpush1.bf16.msra.mxu0 %v709
    %765 = vmatprep.subr.bf16.mxu0 %v708
    %766 = vmatpush1.bf16.msra.mxu0 %v707
    %767 = vmatprep.subr.bf16.mxu0 %v706
    %768 = vmatpush1.bf16.msra.mxu0 %v705
    %769 = vmatprep.subr.bf16.mxu0 %v704
    %770 = vmatpush1.bf16.msra.mxu0 %v703
    %771 = vmatprep.subr.bf16.mxu0 %v702
    %772 = vmatpush1.bf16.msra.mxu0 %v701
    %773 = vmatprep.subr.bf16.mxu0 %v700
    %774 = vmatpush1.bf16.msra.mxu0 %v699
    %775 = vmatprep.subr.bf16.mxu0 %v698
    %776 = vmatpush1.bf16.msra.mxu0 %v697
    %777 = vmatprep.subr.bf16.mxu0 %v728
    %778 = vmatpush2.bf16.msra.mxu0 %v727
    %779 = vmatprep.subr.bf16.mxu0 %v726
    %780 = vmatpush2.bf16.msra.mxu0 %v725
    %781 = vmatprep.subr.bf16.mxu0 %v724
    %782 = vmatpush2.bf16.msra.mxu0 %v723
    %783 = vmatprep.subr.bf16.mxu0 %v722
    %784 = vmatpush2.bf16.msra.mxu0 %v721
    %785 = vmatprep.subr.bf16.mxu0 %v720
    %786 = vmatpush2.bf16.msra.mxu0 %v719
    %787 = vmatprep.subr.bf16.mxu0 %v718
    %788 = vmatpush2.bf16.msra.mxu0 %v717
    %789 = vmatprep.subr.bf16.mxu0 %v716
    %790 = vmatpush2.bf16.msra.mxu0 %v715
    %791 = vmatprep.subr.bf16.mxu0 %v714
    %792 = vmatpush2.bf16.msra.mxu0 %v713
    %793 = vmatprep.mubr.bf16.mxu0 %v556
    %794 = vmatmul.mubr.bf16.gmra.mxu0 %v555
    %v795 = vpop.f32.mrf.mxu0
    %v796 = vadd.f32 %v594, %v795
    %v797 = vpop.f32.mrf.mxu0
    %v798 = vadd.f32 %v598, %v797
    %v799 = vpop.f32.mrf.mxu0
    %v800 = vadd.f32 %v594, %v799
    %v801 = vpop.f32.mrf.mxu0
    %v802 = vadd.f32 %v598, %v801
    %803 = vdwg.mxu0
    %v804 = vmax.f32 %v796, 0.0
    %v805 = vmax.f32 %v798, 0.0
    %v806 = vmax.f32 %v800, 0.0
    %v807 = vmax.f32 %v802, 0.0
    %v808 = vpack.c.bf16 %v806, %v804
    %v809 = vpack.c.bf16 %v807, %v805
    %v810 = vld [vmem:[#allocation12] sm:$0xff]
    %v811 = vld [vmem:[#allocation12 + $0x8] sm:$0xff]
    %v812 = vld [vmem:[#allocation12 + $0x10] sm:$0xff]
    %v813 = vld [vmem:[#allocation12 + $0x18] sm:$0xff]
    %v814 = vld [vmem:[#allocation12 + $0x20] sm:$0xff]
    %v815 = vld [vmem:[#allocation12 + $0x28] sm:$0xff]
    %v816 = vld [vmem:[#allocation12 + $0x30] sm:$0xff]
    %v817 = vld [vmem:[#allocation12 + $0x38] sm:$0xff]
    %v818 = vld [vmem:[#allocation12 + $0x40] sm:$0xff]
    %v819 = vld [vmem:[#allocation12 + $0x48] sm:$0xff]
    %v820 = vld [vmem:[#allocation12 + $0x50] sm:$0xff]
    %v821 = vld [vmem:[#allocation12 + $0x58] sm:$0xff]
    %v822 = vld [vmem:[#allocation12 + $0x60] sm:$0xff]
    %v823 = vld [vmem:[#allocation12 + $0x68] sm:$0xff]
    %v824 = vld [vmem:[#allocation12 + $0x70] sm:$0xff]
    %v825 = vld [vmem:[#allocation12 + $0x78] sm:$0xff]
    %v826 = vld [vmem:[#allocation12 + $0x80] sm:$0xff]
    %v827 = vld [vmem:[#allocation12 + $0x88] sm:$0xff]
    %v828 = vld [vmem:[#allocation12 + $0x90] sm:$0xff]
    %v829 = vld [vmem:[#allocation12 + $0x98] sm:$0xff]
    %v830 = vld [vmem:[#allocation12 + $0xa0] sm:$0xff]
    %v831 = vld [vmem:[#allocation12 + $0xa8] sm:$0xff]
    %v832 = vld [vmem:[#allocation12 + $0xb0] sm:$0xff]
    %v833 = vld [vmem:[#allocation12 + $0xb8] sm:$0xff]
    %v834 = vld [vmem:[#allocation12 + $0xc0] sm:$0xff]
    %v835 = vld [vmem:[#allocation12 + $0xc8] sm:$0xff]
    %v836 = vld [vmem:[#allocation12 + $0xd0] sm:$0xff]
    %v837 = vld [vmem:[#allocation12 + $0xd8] sm:$0xff]
    %v838 = vld [vmem:[#allocation12 + $0xe0] sm:$0xff]
    %v839 = vld [vmem:[#allocation12 + $0xe8] sm:$0xff]
    %v840 = vld [vmem:[#allocation12 + $0xf0] sm:$0xff]
    %v841 = vld [vmem:[#allocation12 + $0xf8] sm:$0xff]
    %v842 = vld [vmem:[%s9] sm:$0x3]
    %v844 = vlaneseq
    %v845 = vshrl.u32 %v844, 7
    %v846 = vsub.s32 0, %v845
    %v847 = vrot.slane %v842, %v846
    %v848 = vlaneseq
    %v849 = vshrl.u32 %v848, 7
    %v850 = vsub.s32 1, %v849
    %v851 = vrot.slane %v842, %v850
    %v886 = vunpack.c.l.b16 %v810
    %v887 = vunpack.c.h.b16 %v810
    %v888 = vunpack.c.l.b16 %v811
    %v889 = vunpack.c.h.b16 %v811
    %v890 = vunpack.c.l.b16 %v812
    %v891 = vunpack.c.h.b16 %v812
    %v892 = vunpack.c.l.b16 %v813
    %v893 = vunpack.c.h.b16 %v813
    %v894 = vunpack.c.l.b16 %v814
    %v895 = vunpack.c.h.b16 %v814
    %v896 = vunpack.c.l.b16 %v815
    %v897 = vunpack.c.h.b16 %v815
    %v898 = vunpack.c.l.b16 %v816
    %v899 = vunpack.c.h.b16 %v816
    %v900 = vunpack.c.l.b16 %v817
    %v901 = vunpack.c.h.b16 %v817
    %v902 = vunpack.c.l.b16 %v818
    %v903 = vunpack.c.h.b16 %v818
    %v904 = vunpack.c.l.b16 %v819
    %v905 = vunpack.c.h.b16 %v819
    %v906 = vunpack.c.l.b16 %v820
    %v907 = vunpack.c.h.b16 %v820
    %v908 = vunpack.c.l.b16 %v821
    %v909 = vunpack.c.h.b16 %v821
    %v910 = vunpack.c.l.b16 %v822
    %v911 = vunpack.c.h.b16 %v822
    %v912 = vunpack.c.l.b16 %v823
    %v913 = vunpack.c.h.b16 %v823
    %v914 = vunpack.c.l.b16 %v824
    %v915 = vunpack.c.h.b16 %v824
    %v916 = vunpack.c.l.b16 %v825
    %v917 = vunpack.c.h.b16 %v825
    %v918 = vunpack.c.l.b16 %v826
    %v919 = vunpack.c.h.b16 %v826
    %v920 = vunpack.c.l.b16 %v827
    %v921 = vunpack.c.h.b16 %v827
    %v922 = vunpack.c.l.b16 %v828
    %v923 = vunpack.c.h.b16 %v828
    %v924 = vunpack.c.l.b16 %v829
    %v925 = vunpack.c.h.b16 %v829
    %v926 = vunpack.c.l.b16 %v830
    %v927 = vunpack.c.h.b16 %v830
    %v928 = vunpack.c.l.b16 %v831
    %v929 = vunpack.c.h.b16 %v831
    %v930 = vunpack.c.l.b16 %v832
    %v931 = vunpack.c.h.b16 %v832
    %v932 = vunpack.c.l.b16 %v833
    %v933 = vunpack.c.h.b16 %v833
    %v934 = vunpack.c.l.b16 %v834
    %v935 = vunpack.c.h.b16 %v834
    %v936 = vunpack.c.l.b16 %v835
    %v937 = vunpack.c.h.b16 %v835
    %v938 = vunpack.c.l.b16 %v836
    %v939 = vunpack.c.h.b16 %v836
    %v940 = vunpack.c.l.b16 %v837
    %v941 = vunpack.c.h.b16 %v837
    %v942 = vunpack.c.l.b16 %v838
    %v943 = vunpack.c.h.b16 %v838
    %v944 = vunpack.c.l.b16 %v839
    %v945 = vunpack.c.h.b16 %v839
    %v946 = vunpack.c.l.b16 %v840
    %v947 = vunpack.c.h.b16 %v840
    %v948 = vunpack.c.l.b16 %v841
    %v949 = vunpack.c.h.b16 %v841
    %v950 = vpack.c.b16 %v888, %v886
    %v951 = vpack.c.b16 %v889, %v887
    %v952 = vpack.c.b16 %v892, %v890
    %v953 = vpack.c.b16 %v893, %v891
    %v954 = vpack.c.b16 %v896, %v894
    %v955 = vpack.c.b16 %v897, %v895
    %v956 = vpack.c.b16 %v900, %v898
    %v957 = vpack.c.b16 %v901, %v899
    %v958 = vpack.c.b16 %v904, %v902
    %v959 = vpack.c.b16 %v905, %v903
    %v960 = vpack.c.b16 %v908, %v906
    %v961 = vpack.c.b16 %v909, %v907
    %v962 = vpack.c.b16 %v912, %v910
    %v963 = vpack.c.b16 %v913, %v911
    %v964 = vpack.c.b16 %v916, %v914
    %v965 = vpack.c.b16 %v917, %v915
    %v966 = vpack.c.b16 %v920, %v918
    %v967 = vpack.c.b16 %v921, %v919
    %v968 = vpack.c.b16 %v924, %v922
    %v969 = vpack.c.b16 %v925, %v923
    %v970 = vpack.c.b16 %v928, %v926
    %v971 = vpack.c.b16 %v929, %v927
    %v972 = vpack.c.b16 %v932, %v930
    %v973 = vpack.c.b16 %v933, %v931
    %v974 = vpack.c.b16 %v936, %v934
    %v975 = vpack.c.b16 %v937, %v935
    %v976 = vpack.c.b16 %v940, %v938
    %v977 = vpack.c.b16 %v941, %v939
    %v978 = vpack.c.b16 %v944, %v942
    %v979 = vpack.c.b16 %v945, %v943
    %v980 = vpack.c.b16 %v948, %v946
    %v981 = vpack.c.b16 %v949, %v947
    %1014 = vmatprep.subr.bf16.mxu0 %v965
    %1015 = vmatpush1.bf16.msra.mxu0 %v964
    %1016 = vmatprep.subr.bf16.mxu0 %v963
    %1017 = vmatpush1.bf16.msra.mxu0 %v962
    %1018 = vmatprep.subr.bf16.mxu0 %v961
    %1019 = vmatpush1.bf16.msra.mxu0 %v960
    %1020 = vmatprep.subr.bf16.mxu0 %v959
    %1021 = vmatpush1.bf16.msra.mxu0 %v958
    %1022 = vmatprep.subr.bf16.mxu0 %v957
    %1023 = vmatpush1.bf16.msra.mxu0 %v956
    %1024 = vmatprep.subr.bf16.mxu0 %v955
    %1025 = vmatpush1.bf16.msra.mxu0 %v954
    %1026 = vmatprep.subr.bf16.mxu0 %v953
    %1027 = vmatpush1.bf16.msra.mxu0 %v952
    %1028 = vmatprep.subr.bf16.mxu0 %v951
    %1029 = vmatpush1.bf16.msra.mxu0 %v950
    %1030 = vmatprep.subr.bf16.mxu0 %v981
    %1031 = vmatpush2.bf16.msra.mxu0 %v980
    %1032 = vmatprep.subr.bf16.mxu0 %v979
    %1033 = vmatpush2.bf16.msra.mxu0 %v978
    %1034 = vmatprep.subr.bf16.mxu0 %v977
    %1035 = vmatpush2.bf16.msra.mxu0 %v976
    %1036 = vmatprep.subr.bf16.mxu0 %v975
    %1037 = vmatpush2.bf16.msra.mxu0 %v974
    %1038 = vmatprep.subr.bf16.mxu0 %v973
    %1039 = vmatpush2.bf16.msra.mxu0 %v972
    %1040 = vmatprep.subr.bf16.mxu0 %v971
    %1041 = vmatpush2.bf16.msra.mxu0 %v970
    %1042 = vmatprep.subr.bf16.mxu0 %v969
    %1043 = vmatpush2.bf16.msra.mxu0 %v968
    %1044 = vmatprep.subr.bf16.mxu0 %v967
    %1045 = vmatpush2.bf16.msra.mxu0 %v966
    %1046 = vmatprep.mubr.bf16.mxu0 %v809
    %1047 = vmatmul.mubr.bf16.gmra.mxu0 %v808
    %v1048 = vpop.f32.mrf.mxu0
    %v1049 = vadd.f32 %v847, %v1048
    %v1050 = vpop.f32.mrf.mxu0
    %v1051 = vadd.f32 %v851, %v1050
    %v1052 = vpop.f32.mrf.mxu0
    %v1053 = vadd.f32 %v847, %v1052
    %v1054 = vpop.f32.mrf.mxu0
    %v1055 = vadd.f32 %v851, %v1054
    %1056 = vdwg.mxu0
    %v1057 = vmax.f32 %v1049, 0.0
    %v1058 = vmax.f32 %v1051, 0.0
    %v1059 = vmax.f32 %v1053, 0.0
    %v1060 = vmax.f32 %v1055, 0.0
    %v1061 = vpack.c.bf16 %v1059, %v1057
    %v1062 = vpack.c.bf16 %v1060, %v1058
    %v1063 = vld [vmem:[#allocation13] sm:$0xf]
    %v1064 = vld [vmem:[#allocation13 + $0x4] sm:$0xf]
    %v1065 = vld [vmem:[#allocation13 + $0x8] sm:$0xf]
    %v1066 = vld [vmem:[#allocation13 + $0xc] sm:$0xf]
    %v1067 = vld [vmem:[#allocation13 + $0x10] sm:$0xf]
    %v1068 = vld [vmem:[#allocation13 + $0x14] sm:$0xf]
    %v1069 = vld [vmem:[#allocation13 + $0x18] sm:$0xf]
    %v1070 = vld [vmem:[#allocation13 + $0x1c] sm:$0xf]
    %v1071 = vld [vmem:[#allocation13 + $0x20] sm:$0xf]
    %v1072 = vld [vmem:[#allocation13 + $0x24] sm:$0xf]
    %v1073 = vld [vmem:[#allocation13 + $0x28] sm:$0xf]
    %v1074 = vld [vmem:[#allocation13 + $0x2c] sm:$0xf]
    %v1075 = vld [vmem:[#allocation13 + $0x30] sm:$0xf]
    %v1076 = vld [vmem:[#allocation13 + $0x34] sm:$0xf]
    %v1077 = vld [vmem:[#allocation13 + $0x38] sm:$0xf]
    %v1078 = vld [vmem:[#allocation13 + $0x3c] sm:$0xf]
    %v1079 = vld [vmem:[#allocation13 + $0x40] sm:$0xf]
    %v1080 = vld [vmem:[#allocation13 + $0x44] sm:$0xf]
    %v1081 = vld [vmem:[#allocation13 + $0x48] sm:$0xf]
    %v1082 = vld [vmem:[#allocation13 + $0x4c] sm:$0xf]
    %v1083 = vld [vmem:[#allocation13 + $0x50] sm:$0xf]
    %v1084 = vld [vmem:[#allocation13 + $0x54] sm:$0xf]
    %v1085 = vld [vmem:[#allocation13 + $0x58] sm:$0xf]
    %v1086 = vld [vmem:[#allocation13 + $0x5c] sm:$0xf]
    %v1087 = vld [vmem:[#allocation13 + $0x60] sm:$0xf]
    %v1088 = vld [vmem:[#allocation13 + $0x64] sm:$0xf]
    %v1089 = vld [vmem:[#allocation13 + $0x68] sm:$0xf]
    %v1090 = vld [vmem:[#allocation13 + $0x6c] sm:$0xf]
    %v1091 = vld [vmem:[#allocation13 + $0x70] sm:$0xf]
    %v1092 = vld [vmem:[#allocation13 + $0x74] sm:$0xf]
    %v1093 = vld [vmem:[#allocation13 + $0x78] sm:$0xf]
    %v1094 = vld [vmem:[#allocation13 + $0x7c] sm:$0xf]
    %v1095 = vld [vmem:[%s11] sm:$0x1]
    %v1097 = vlaneseq
    %v1098 = vshrl.u32 %v1097, 7
    %v1099 = vsub.s32 0, %v1098
    %v1100 = vrot.slane %v1095, %v1099
    %v1134 = vunpack.c.l.b16 %v1063
    %v1135 = vunpack.c.l.b16 %v1064
    %v1136 = vunpack.c.l.b16 %v1065
    %v1137 = vunpack.c.l.b16 %v1066
    %v1138 = vunpack.c.l.b16 %v1067
    %v1139 = vunpack.c.l.b16 %v1068
    %v1140 = vunpack.c.l.b16 %v1069
    %v1141 = vunpack.c.l.b16 %v1070
    %v1142 = vunpack.c.l.b16 %v1071
    %v1143 = vunpack.c.l.b16 %v1072
    %v1144 = vunpack.c.l.b16 %v1073
    %v1145 = vunpack.c.l.b16 %v1074
    %v1146 = vunpack.c.l.b16 %v1075
    %v1147 = vunpack.c.l.b16 %v1076
    %v1148 = vunpack.c.l.b16 %v1077
    %v1149 = vunpack.c.l.b16 %v1078
    %v1150 = vunpack.c.l.b16 %v1079
    %v1151 = vunpack.c.l.b16 %v1080
    %v1152 = vunpack.c.l.b16 %v1081
    %v1153 = vunpack.c.l.b16 %v1082
    %v1154 = vunpack.c.l.b16 %v1083
    %v1155 = vunpack.c.l.b16 %v1084
    %v1156 = vunpack.c.l.b16 %v1085
    %v1157 = vunpack.c.l.b16 %v1086
    %v1158 = vunpack.c.l.b16 %v1087
    %v1159 = vunpack.c.l.b16 %v1088
    %v1160 = vunpack.c.l.b16 %v1089
    %v1161 = vunpack.c.l.b16 %v1090
    %v1162 = vunpack.c.l.b16 %v1091
    %v1163 = vunpack.c.l.b16 %v1092
    %v1164 = vunpack.c.l.b16 %v1093
    %v1165 = vunpack.c.l.b16 %v1094
    %v1166 = vpack.c.b16 %v1135, %v1134
    %v1167 = vpack.c.b16 %v1137, %v1136
    %v1168 = vpack.c.b16 %v1139, %v1138
    %v1169 = vpack.c.b16 %v1141, %v1140
    %v1170 = vpack.c.b16 %v1143, %v1142
    %v1171 = vpack.c.b16 %v1145, %v1144
    %v1172 = vpack.c.b16 %v1147, %v1146
    %v1173 = vpack.c.b16 %v1149, %v1148
    %v1174 = vpack.c.b16 %v1151, %v1150
    %v1175 = vpack.c.b16 %v1153, %v1152
    %v1176 = vpack.c.b16 %v1155, %v1154
    %v1177 = vpack.c.b16 %v1157, %v1156
    %v1178 = vpack.c.b16 %v1159, %v1158
    %v1179 = vpack.c.b16 %v1161, %v1160
    %v1180 = vpack.c.b16 %v1163, %v1162
    %v1181 = vpack.c.b16 %v1165, %v1164
    %1198 = vmatprep.subr.bf16.mxu0 0
    %1199 = vmatpush1.bf16.msra.mxu0 %v1173
    %1200 = vmatprep.subr.bf16.mxu0 0
    %1201 = vmatpush1.bf16.msra.mxu0 %v1172
    %1202 = vmatprep.subr.bf16.mxu0 0
    %1203 = vmatpush1.bf16.msra.mxu0 %v1171
    %1204 = vmatprep.subr.bf16.mxu0 0
    %1205 = vmatpush1.bf16.msra.mxu0 %v1170
    %1206 = vmatprep.subr.bf16.mxu0 0
    %1207 = vmatpush1.bf16.msra.mxu0 %v1169
    %1208 = vmatprep.subr.bf16.mxu0 0
    %1209 = vmatpush1.bf16.msra.mxu0 %v1168
    %1210 = vmatprep.subr.bf16.mxu0 0
    %1211 = vmatpush1.bf16.msra.mxu0 %v1167
    %1212 = vmatprep.subr.bf16.mxu0 0
    %1213 = vmatpush1.bf16.msra.mxu0 %v1166
    %1214 = vmatprep.subr.bf16.mxu0 0
    %1215 = vmatpush2.bf16.msra.mxu0 %v1181
    %1216 = vmatprep.subr.bf16.mxu0 0
    %1217 = vmatpush2.bf16.msra.mxu0 %v1180
    %1218 = vmatprep.subr.bf16.mxu0 0
    %1219 = vmatpush2.bf16.msra.mxu0 %v1179
    %1220 = vmatprep.subr.bf16.mxu0 0
    %1221 = vmatpush2.bf16.msra.mxu0 %v1178
    %1222 = vmatprep.subr.bf16.mxu0 0
    %1223 = vmatpush2.bf16.msra.mxu0 %v1177
    %1224 = vmatprep.subr.bf16.mxu0 0
    %1225 = vmatpush2.bf16.msra.mxu0 %v1176
    %1226 = vmatprep.subr.bf16.mxu0 0
    %1227 = vmatpush2.bf16.msra.mxu0 %v1175
    %1228 = vmatprep.subr.bf16.mxu0 0
    %1229 = vmatpush2.bf16.msra.mxu0 %v1174
    %1230 = vmatprep.mubr.bf16.mxu0 %v1062
    %1231 = vmatmul.mubr.bf16.gmra.mxu0 %v1061
    %v1232 = vpop.f32.mrf.mxu0
    %v1233 = vadd.f32 %v1100, %v1232
    %v1234 = vpop.f32.mrf.mxu0
    %v1235 = vpop.f32.mrf.mxu0
    %v1236 = vadd.f32 %v1100, %v1235
    %v1237 = vpop.f32.mrf.mxu0
    %1238 = vdwg.mxu0
    %1239 = vst [vmem:[#allocation15] sm:$0xff] %v1233
    %1240 = vst [vmem:[#allocation15 + $0x8] sm:$0xff] %v1236
    // Predicated region
    $region70: #{tpu_custom_call.1} parent=1 // pred_check
      _
    $region71: #{tpu_custom_call.1} parent=1 // pred_check_branch
      %1242 = sbr.rel (0) target = $region73
    $region72: #{tpu_custom_call.1} parent=1 // pred_region
      %s1244 = ssub.s32 256, 256
      %1245 = vsyncadd [#allocation6], %s1244
      %s1246 = sshll.u32 [#allocation15], 4
      %s1247 = int_to_ptr.vmem [resolvable:$true] %s1246
      %1252 = dma.vmem_to_hbm [thread:$0]  %s1247, 256, %s12, [#allocation6], 128, 128, 8
    $region73: #{tpu_custom_call.1} parent=1 // pred_fallthru
      _
    // Predicated region
    $region74: #{tpu_custom_call.1} parent=1 // pred_check
      _
    $region75: #{tpu_custom_call.1} parent=1 // pred_check_branch
      %1254 = sbr.rel (0) target = $region77
    $region76: #{tpu_custom_call.1} parent=1 // pred_region
      %1255 = dma.done [#allocation6], 256
    $region77: #{tpu_custom_call.1} parent=1 // pred_fallthru
      _
    %1256 = vsyncpa [#allocation5], 1
    %1257 = vsyncpa [#allocation8], 1
    %1258 = vsyncpa [#allocation11], 1
    %1259 = vsyncpa [#allocation14], 1
    %1260 = vsyncpa [#allocation6], 1

</llo_original>
